<compile_context>
chip_gen: v6e
topology: v6e:2x2x1
jax: 0.10.0
libtpu: 0.0.40
codegen_flags: <defaults>
</compile_context>

<pallas_src>
import jax
import jax.numpy as jnp
from jax.experimental import pallas as pl
from jax.experimental.pallas import tpu as pltpu

# ---- model dimensions (small, consistent with the module) ----
B = 2                      # batch
C, H, W = 4, 16, 16        # dimensions = (C, H, W)
D = C * H * W              # img_size = prod(dimensions) = 1024
HID = 256                  # hidden width of the eps-prediction network
T_STEPS = 100              # noise_schedule.time_steps
B_PAD = 8                  # pad batch to a full f32 sublane


def _eps_net_kernel(t_ref, x_ref, w1_ref, temb_ref, w2_ref, b2_ref, o_ref,
                    temb_sc):
    """Fused time-conditioned MLP: relu(x@W1 + temb[t]) @ W2 + b2.

    t_ref:    (BP,)        i32  SMEM (scalar prefetch)
    x_ref:    (BP, D)      f32  VMEM
    w1_ref:   (D, HID)     bf16 VMEM
    temb_ref: (T_STEPS,HID)f32  VMEM (b1 already folded in)
    w2_ref:   (HID, D)     bf16 VMEM
    b2_ref:   (1, D)       f32  VMEM
    temb_sc:  (BP, HID)    f32  VMEM scratch (gathered embeddings)
    """
    bp = x_ref.shape[0]

    # First matmul: bf16 on the MXU, f32 accumulation.
    h = jnp.dot(x_ref[...].astype(jnp.bfloat16), w1_ref[...],
                preferred_element_type=jnp.float32)

    # In-kernel gather of the per-sample time embedding rows (dynamic sublane
    # slices from the full table, unrolled over the tiny padded batch).
    for i in range(bp):
        temb_sc[pl.ds(i, 1), :] = temb_ref[pl.ds(t_ref[i], 1), :]

    h = jnp.maximum(h + temb_sc[...], 0.0)               # f32 bias/ReLU on VPU

    # Second matmul: cast activations to bf16, accumulate in f32.
    o = jnp.dot(h.astype(jnp.bfloat16), w2_ref[...],
                preferred_element_type=jnp.float32)
    o_ref[...] = (o + b2_ref[...]).astype(o_ref.dtype)   # lane-dense store (D=1024)


def eps_network_pallas(x_flat, t, params):
    """x_flat: (BP, D) f32, t: (BP,) i32 -> (BP, D) f32. Single pallas_call."""
    w1, temb_tbl, w2, b2 = params
    bp = x_flat.shape[0]
    # index_maps receive (grid idx, *scalar-prefetch refs) positionally.
    full = lambda shape: pl.BlockSpec(shape, lambda i, t_ref: (0, 0))
    return pl.pallas_call(
        _eps_net_kernel,
        out_shape=jax.ShapeDtypeStruct((bp, D), jnp.float32),
        grid_spec=pltpu.PrefetchScalarGridSpec(
            num_scalar_prefetch=1,          # t -> SMEM, gathered in-kernel
            grid=(1,),
            in_specs=[
                full((bp, D)),              # x (f32, cast to bf16 in-kernel)
                full((D, HID)),             # W1 (bf16)
                full((T_STEPS, HID)),       # time-embedding table + b1 (f32)
                full((HID, D)),             # W2 (bf16)
                full((1, D)),               # b2 (f32)
            ],
            out_specs=full((bp, D)),
            scratch_shapes=[pltpu.VMEM((bp, HID), jnp.float32)],
        ),
        # grid=(1,): no pipelining to configure; total VMEM footprint ~1.2 MiB
        # (fits the default scoped limit on v5e/v6e/v7x).
        compiler_params=pltpu.CompilerParams(
            dimension_semantics=("arbitrary",)),
    )(t, x_flat, w1, temb_tbl, w2, b2)


class SimpleModelPallas:
    """JAX/Pallas re-implementation of SimpleModel.forward(x, t) = network(x, t)."""

    def __init__(self, key):
        k1, k2, k3 = jax.random.split(key, 3)
        scale1 = 1.0 / jnp.sqrt(jnp.float32(D))
        scale2 = 1.0 / jnp.sqrt(jnp.float32(HID))
        # bf16 weights: halves the dominant HBM/VMEM traffic; f32 accumulation
        # is preserved inside the kernel via preferred_element_type.
        self.w1 = (jax.random.normal(k1, (D, HID), jnp.float32) * scale1
                   ).astype(jnp.bfloat16)
        self.w2 = (jax.random.normal(k2, (HID, D), jnp.float32) * scale2
                   ).astype(jnp.bfloat16)
        b1 = jnp.zeros((1, HID), jnp.float32)
        self.b2 = jnp.zeros((1, D), jnp.float32)
        # learned time-step embedding table with b1 folded in (f32, ~100 KiB)
        self.t_table = (jax.random.normal(k3, (T_STEPS, HID), jnp.float32) * 0.02
                        + b1)
        self.dimensions = (C, H, W)

    def forward(self, x, t):
        # x: (B, C, H, W) float32 (NCHW, matching PyTorch); t: (B,) int32
        b = x.shape[0]
        x_flat = x.reshape(b, -1)                          # glue: flatten
        bp = max(B_PAD, pl.cdiv(b, 8) * 8)                 # pad to full sublanes
        x_p = jnp.pad(x_flat, ((0, bp - b), (0, 0)))
        t_p = jnp.pad(t.astype(jnp.int32), (0, bp - b))    # pad rows use t=0
        eps = eps_network_pallas(
            x_p, t_p, (self.w1, self.t_table, self.w2, self.b2))
        return eps[:b].reshape(b, *self.dimensions)        # glue: back to NCHW

    __call__ = forward


if __name__ == "__main__":
    key = jax.random.PRNGKey(0)
    k_model, k_x, k_t = jax.random.split(key, 3)

    model = SimpleModelPallas(k_model)

    x = jax.random.normal(k_x, (B, C, H, W), jnp.float32)     # noisy image x_t
    t = jax.random.randint(k_t, (B,), 0, T_STEPS, jnp.int32)  # time steps

    pred = model(x, t)
    jax.block_until_ready(pred)

    # sanity: output shape mirrors the input image dimensions (eps prediction)
    assert pred.shape == (B, C, H, W), pred.shape
    assert pred.dtype == jnp.float32

    # cross-check against a pure-JAX reference using the identical
    # bf16-weight / f32-accumulate recipe
    x_flat = x.reshape(B, -1)
    temb = jnp.take(model.t_table, t, axis=0)
    h_ref = jnp.dot(x_flat.astype(jnp.bfloat16), model.w1,
                    preferred_element_type=jnp.float32) + temb
    h_ref = jnp.maximum(h_ref, 0.0)
    ref = jnp.dot(h_ref.astype(jnp.bfloat16), model.w2,
                  preferred_element_type=jnp.float32) + model.b2
    ref = ref.reshape(B, C, H, W)
    assert jnp.allclose(pred, ref, atol=1e-2, rtol=1e-2), \
        float(jnp.max(jnp.abs(pred - ref)))

    print("KERNEL_OK")
</pallas_src>

<mosaic_0001>
module attributes {stable_mosaic.version = 11 : i64} {
  func.func @_eps_net_kernel(%arg0: i32, %arg1: memref<8xi32, #tpu.memory_space<smem>>, %arg2: memref<8x1024xf32, #tpu.memory_space<vmem>>, %arg3: memref<1024x256xbf16, #tpu.memory_space<vmem>>, %arg4: memref<100x256xf32, #tpu.memory_space<vmem>>, %arg5: memref<256x1024xbf16, #tpu.memory_space<vmem>>, %arg6: memref<1x1024xf32, #tpu.memory_space<vmem>>, %arg7: memref<8x1024xf32, #tpu.memory_space<vmem>>, %arg8: memref<8x256xf32, #tpu.memory_space<vmem>>) attributes {dimension_semantics = [#tpu.dimension_semantics<arbitrary>], iteration_bounds = array<i64: 1>, scalar_prefetch = 1 : i64, scratch_operands = 1 : i64, tpu.core_type = #tpu.core_type<tc>, window_params = [{pipeline_mode = #tpu.pipeline_mode<synchronous>, transform_indices = @transform_0, window_bounds = array<i64: 8, 1024>}, {pipeline_mode = #tpu.pipeline_mode<synchronous>, transform_indices = @transform_1, window_bounds = array<i64: 1024, 256>}, {pipeline_mode = #tpu.pipeline_mode<synchronous>, transform_indices = @transform_2, window_bounds = array<i64: 100, 256>}, {pipeline_mode = #tpu.pipeline_mode<synchronous>, transform_indices = @transform_3, window_bounds = array<i64: 256, 1024>}, {pipeline_mode = #tpu.pipeline_mode<synchronous>, transform_indices = @transform_4, window_bounds = array<i64: 1, 1024>}, {pipeline_mode = #tpu.pipeline_mode<synchronous>, transform_indices = @transform_5, window_bounds = array<i64: 8, 1024>}]} {
    %c0 = arith.constant 0 : index
    %c0_0 = arith.constant 0 : index
    %0 = vector.load %arg2[%c0, %c0_0] : memref<8x1024xf32, #tpu.memory_space<vmem>>, vector<8x1024xf32>
    %1 = arith.truncf %0 : vector<8x1024xf32> to vector<8x1024xbf16>
    %c0_1 = arith.constant 0 : index
    %c0_2 = arith.constant 0 : index
    %2 = vector.load %arg3[%c0_1, %c0_2] : memref<1024x256xbf16, #tpu.memory_space<vmem>>, vector<1024x256xbf16>
    %cst = arith.constant dense<0.000000e+00> : vector<8x256xf32>
    %3 = tpu.matmul %1, %2, %cst {dimension_numbers = #tpu.dot_dimension_numbers<[1], [0], [0], [1], [0, 0, 1, 1], [], []>} : vector<8x1024xbf16>, vector<1024x256xbf16>, vector<8x256xf32> -> vector<8x256xf32>
    %c0_3 = arith.constant 0 : index
    %4 = memref.load %arg1[%c0_3] : memref<8xi32, #tpu.memory_space<smem>>
    %5 = arith.index_cast %4 : i32 to index
    %c0_4 = arith.constant 0 : index
    %6 = vector.load %arg4[%5, %c0_4] : memref<100x256xf32, #tpu.memory_space<vmem>>, vector<1x256xf32>
    %c0_5 = arith.constant 0 : index
    %c0_6 = arith.constant 0 : index
    %7 = vector.load %arg8[%c0_5, %c0_6] : memref<8x256xf32, #tpu.memory_space<vmem>>, vector<1x256xf32>
    tpu.vector_store %arg8[%c0_5, %c0_6], %6 {strides = array<i32>} : memref<8x256xf32, #tpu.memory_space<vmem>>, vector<1x256xf32>,
    %c1 = arith.constant 1 : index
    %8 = memref.load %arg1[%c1] : memref<8xi32, #tpu.memory_space<smem>>
    %9 = arith.index_cast %8 : i32 to index
    %c0_7 = arith.constant 0 : index
    %10 = vector.load %arg4[%9, %c0_7] : memref<100x256xf32, #tpu.memory_space<vmem>>, vector<1x256xf32>
    %c1_8 = arith.constant 1 : index
    %c0_9 = arith.constant 0 : index
    %11 = vector.load %arg8[%c1_8, %c0_9] : memref<8x256xf32, #tpu.memory_space<vmem>>, vector<1x256xf32>
    tpu.vector_store %arg8[%c1_8, %c0_9], %10 {strides = array<i32>} : memref<8x256xf32, #tpu.memory_space<vmem>>, vector<1x256xf32>,
    %c2 = arith.constant 2 : index
    %12 = memref.load %arg1[%c2] : memref<8xi32, #tpu.memory_space<smem>>
    %13 = arith.index_cast %12 : i32 to index
    %c0_10 = arith.constant 0 : index
    %14 = vector.load %arg4[%13, %c0_10] : memref<100x256xf32, #tpu.memory_space<vmem>>, vector<1x256xf32>
    %c2_11 = arith.constant 2 : index
    %c0_12 = arith.constant 0 : index
    %15 = vector.load %arg8[%c2_11, %c0_12] : memref<8x256xf32, #tpu.memory_space<vmem>>, vector<1x256xf32>
    tpu.vector_store %arg8[%c2_11, %c0_12], %14 {strides = array<i32>} : memref<8x256xf32, #tpu.memory_space<vmem>>, vector<1x256xf32>,
    %c3 = arith.constant 3 : index
    %16 = memref.load %arg1[%c3] : memref<8xi32, #tpu.memory_space<smem>>
    %17 = arith.index_cast %16 : i32 to index
    %c0_13 = arith.constant 0 : index
    %18 = vector.load %arg4[%17, %c0_13] : memref<100x256xf32, #tpu.memory_space<vmem>>, vector<1x256xf32>
    %c3_14 = arith.constant 3 : index
    %c0_15 = arith.constant 0 : index
    %19 = vector.load %arg8[%c3_14, %c0_15] : memref<8x256xf32, #tpu.memory_space<vmem>>, vector<1x256xf32>
    tpu.vector_store %arg8[%c3_14, %c0_15], %18 {strides = array<i32>} : memref<8x256xf32, #tpu.memory_space<vmem>>, vector<1x256xf32>,
    %c4 = arith.constant 4 : index
    %20 = memref.load %arg1[%c4] : memref<8xi32, #tpu.memory_space<smem>>
    %21 = arith.index_cast %20 : i32 to index
    %c0_16 = arith.constant 0 : index
    %22 = vector.load %arg4[%21, %c0_16] : memref<100x256xf32, #tpu.memory_space<vmem>>, vector<1x256xf32>
    %c4_17 = arith.constant 4 : index
    %c0_18 = arith.constant 0 : index
    %23 = vector.load %arg8[%c4_17, %c0_18] : memref<8x256xf32, #tpu.memory_space<vmem>>, vector<1x256xf32>
    tpu.vector_store %arg8[%c4_17, %c0_18], %22 {strides = array<i32>} : memref<8x256xf32, #tpu.memory_space<vmem>>, vector<1x256xf32>,
    %c5 = arith.constant 5 : index
    %24 = memref.load %arg1[%c5] : memref<8xi32, #tpu.memory_space<smem>>
    %25 = arith.index_cast %24 : i32 to index
    %c0_19 = arith.constant 0 : index
    %26 = vector.load %arg4[%25, %c0_19] : memref<100x256xf32, #tpu.memory_space<vmem>>, vector<1x256xf32>
    %c5_20 = arith.constant 5 : index
    %c0_21 = arith.constant 0 : index
    %27 = vector.load %arg8[%c5_20, %c0_21] : memref<8x256xf32, #tpu.memory_space<vmem>>, vector<1x256xf32>
    tpu.vector_store %arg8[%c5_20, %c0_21], %26 {strides = array<i32>} : memref<8x256xf32, #tpu.memory_space<vmem>>, vector<1x256xf32>,
    %c6 = arith.constant 6 : index
    %28 = memref.load %arg1[%c6] : memref<8xi32, #tpu.memory_space<smem>>
    %29 = arith.index_cast %28 : i32 to index
    %c0_22 = arith.constant 0 : index
    %30 = vector.load %arg4[%29, %c0_22] : memref<100x256xf32, #tpu.memory_space<vmem>>, vector<1x256xf32>
    %c6_23 = arith.constant 6 : index
    %c0_24 = arith.constant 0 : index
    %31 = vector.load %arg8[%c6_23, %c0_24] : memref<8x256xf32, #tpu.memory_space<vmem>>, vector<1x256xf32>
    tpu.vector_store %arg8[%c6_23, %c0_24], %30 {strides = array<i32>} : memref<8x256xf32, #tpu.memory_space<vmem>>, vector<1x256xf32>,
    %c7 = arith.constant 7 : index
    %32 = memref.load %arg1[%c7] : memref<8xi32, #tpu.memory_space<smem>>
    %33 = arith.index_cast %32 : i32 to index
    %c0_25 = arith.constant 0 : index
    %34 = vector.load %arg4[%33, %c0_25] : memref<100x256xf32, #tpu.memory_space<vmem>>, vector<1x256xf32>
    %c7_26 = arith.constant 7 : index
    %c0_27 = arith.constant 0 : index
    %35 = vector.load %arg8[%c7_26, %c0_27] : memref<8x256xf32, #tpu.memory_space<vmem>>, vector<1x256xf32>
    tpu.vector_store %arg8[%c7_26, %c0_27], %34 {strides = array<i32>} : memref<8x256xf32, #tpu.memory_space<vmem>>, vector<1x256xf32>,
    %c0_28 = arith.constant 0 : index
    %c0_29 = arith.constant 0 : index
    %36 = vector.load %arg8[%c0_28, %c0_29] : memref<8x256xf32, #tpu.memory_space<vmem>>, vector<8x256xf32>
    %37 = arith.addf %3, %36 : vector<8x256xf32>
    %cst_30 = arith.constant 0.000000e+00 : f32
    %38 = vector.broadcast %cst_30 : f32 to vector<8x256xf32>
    %39 = arith.maximumf %37, %38 : vector<8x256xf32>
    %40 = arith.truncf %39 : vector<8x256xf32> to vector<8x256xbf16>
    %c0_31 = arith.constant 0 : index
    %c0_32 = arith.constant 0 : index
    %41 = vector.load %arg5[%c0_31, %c0_32] : memref<256x1024xbf16, #tpu.memory_space<vmem>>, vector<256x1024xbf16>
    %cst_33 = arith.constant dense<0.000000e+00> : vector<8x1024xf32>
    %42 = tpu.matmul %40, %41, %cst_33 {dimension_numbers = #tpu.dot_dimension_numbers<[1], [0], [0], [1], [0, 0, 1, 1], [], []>} : vector<8x256xbf16>, vector<256x1024xbf16>, vector<8x1024xf32> -> vector<8x1024xf32>
    %c0_34 = arith.constant 0 : index
    %c0_35 = arith.constant 0 : index
    %43 = vector.load %arg6[%c0_34, %c0_35] : memref<1x1024xf32, #tpu.memory_space<vmem>>, vector<1x1024xf32>
    %44 = vector.broadcast %43 : vector<1x1024xf32> to vector<8x1024xf32>
    %45 = arith.addf %42, %44 : vector<8x1024xf32>
    %c0_36 = arith.constant 0 : index
    %c0_37 = arith.constant 0 : index
    %46 = vector.load %arg7[%c0_36, %c0_37] : memref<8x1024xf32, #tpu.memory_space<vmem>>, vector<8x1024xf32>
    tpu.vector_store %arg7[%c0_36, %c0_37], %45 {strides = array<i32>} : memref<8x1024xf32, #tpu.memory_space<vmem>>, vector<8x1024xf32>,
    return
  }
  func.func @transform_0(%arg0: i32, %arg1: memref<8xi32, #tpu.memory_space<smem>>) -> (i32, i32) {
    %c0_i32 = arith.constant 0 : i32
    %c0_i32_0 = arith.constant 0 : i32
    %c0_i32_1 = arith.constant 0 : i32
    return %c0_i32, %c0_i32_0 : i32, i32
  }
  func.func @transform_1(%arg0: i32, %arg1: memref<8xi32, #tpu.memory_space<smem>>) -> (i32, i32) {
    %c0_i32 = arith.constant 0 : i32
    %c0_i32_0 = arith.constant 0 : i32
    %c0_i32_1 = arith.constant 0 : i32
    return %c0_i32, %c0_i32_0 : i32, i32
  }
  func.func @transform_2(%arg0: i32, %arg1: memref<8xi32, #tpu.memory_space<smem>>) -> (i32, i32) {
    %c0_i32 = arith.constant 0 : i32
    %c0_i32_0 = arith.constant 0 : i32
    %c0_i32_1 = arith.constant 0 : i32
    return %c0_i32, %c0_i32_0 : i32, i32
  }
  func.func @transform_3(%arg0: i32, %arg1: memref<8xi32, #tpu.memory_space<smem>>) -> (i32, i32) {
    %c0_i32 = arith.constant 0 : i32
    %c0_i32_0 = arith.constant 0 : i32
    %c0_i32_1 = arith.constant 0 : i32
    return %c0_i32, %c0_i32_0 : i32, i32
  }
  func.func @transform_4(%arg0: i32, %arg1: memref<8xi32, #tpu.memory_space<smem>>) -> (i32, i32) {
    %c0_i32 = arith.constant 0 : i32
    %c0_i32_0 = arith.constant 0 : i32
    %c0_i32_1 = arith.constant 0 : i32
    return %c0_i32, %c0_i32_0 : i32, i32
  }
  func.func @transform_5(%arg0: i32, %arg1: memref<8xi32, #tpu.memory_space<smem>>) -> (i32, i32) {
    %c0_i32 = arith.constant 0 : i32
    %c0_i32_0 = arith.constant 0 : i32
    %c0_i32_1 = arith.constant 0 : i32
    return %c0_i32, %c0_i32_0 : i32, i32
  }
}

</mosaic_0001>

<llo_original>
// kernel: tpu_custom_call.1
$region0: #{tpu_custom_call.1}
  #allocation0 [shape = 'u32[]', space=smem, size = 0x4, offset = 0x4, fixed_abs, tag = 'smem constant byte address 0x4 - core index']
  #allocation1 [shape = 'u32[144,128]{1,0:T(1,128)}', space=vmem, size = 0x12000, scoped, tag = 'internal scratch']
  #allocation2 [shape = 'f32[8,256]{1,0:T(8,128)}', space=vmem, size = 0x2000, scoped, tag = 'scratch operand']
  #allocation3 [shape = 's32[1]{0}', space=sflag, size = 0x4, scoped, tag = 'scoped memory for tpu_custom_call.1']
  #allocation4 [shape = 'u8[512]{0}', space=smem, size = 0x200, scoped, tag = 'prefetched SMEM operand 0']
  %s0 = inlined_call_operand.hbm [shape: s32[8], index: 0, kind: input, shape index: {}]
  %s1 = inlined_call_operand.hbm [shape: f32[8,1024], index: 1, kind: input, shape index: {}]
  %s2 = inlined_call_operand.hbm [shape: bf16[1024,256], index: 2, kind: input, shape index: {}]
  %s3 = inlined_call_operand.hbm [shape: f32[100,256], index: 3, kind: input, shape index: {}]
  %s4 = inlined_call_operand.hbm [shape: bf16[256,1024], index: 4, kind: input, shape index: {}]
  %s5 = inlined_call_operand.vmem [shape: f32[1,1024], index: 5, kind: input, shape index: {}]
  %s6 = inlined_call_operand.hbm [shape: f32[8,1024], index: 6, kind: output, shape index: {}]
  %s7 = sld [smem:[#allocation0]]
  $region46: #{tpu_custom_call.1} parent=0
    _
  %s9 = ssub.s32 1, %s7
  %s10 = scalar_select 0, %s9, %s7
  %12 = dma.hbm_to_smem %s0, 16, [#allocation4], [#allocation3]
  %13 = dma.done [#allocation3], 16
  %14 = sfence
  $region1: #{tpu_custom_call.1} parent=0
    #allocation5 [shape = 'u8[32768]{0}', space=vmem, size = 0x8000, scoped, tag = 'input window, operand 1, single buffered']
    #allocation6 [shape = 's32[1]{0}', space=sflag, size = 0x4, scoped, tag = 'scoped memory for tpu_custom_call.1']
    #allocation7 [shape = 's32[1]{0}', space=sflag, size = 0x4, scoped, tag = 'scoped memory for tpu_custom_call.1']
    #allocation8 [shape = 'u8[524288]{0}', space=vmem, size = 0x80000, scoped, tag = 'input window, operand 2, single buffered']
    #allocation9 [shape = 's32[1]{0}', space=sflag, size = 0x4, scoped, tag = 'scoped memory for tpu_custom_call.1']
    #allocation10 [shape = 'u8[106496]{0}', space=vmem, size = 0x1a000, scoped, tag = 'input window, operand 3, single buffered']
    #allocation11 [shape = 'u8[524288]{0}', space=vmem, size = 0x80000, scoped, tag = 'input window, operand 4, single buffered']
    #allocation12 [shape = 's32[1]{0}', space=sflag, size = 0x4, scoped, tag = 'scoped memory for tpu_custom_call.1']
    #allocation13 [shape = 'u8[32768]{0}', space=vmem, size = 0x8000, scoped, tag = 'output window, operand 0, single buffered']
    %15 = vsyncpa [#allocation6], 0
    %16 = vsyncpa [#allocation9], 0
    %17 = vsyncpa [#allocation12], 0
    %18 = vsyncpa [#allocation7], 0
    // Predicated region
    $region2: #{tpu_custom_call.1} parent=1 // pred_check
      _
    $region3: #{tpu_custom_call.1} parent=1 // pred_check_branch
      %20 = sbr.rel (0) target = $region5
    $region4: #{tpu_custom_call.1} parent=1 // pred_region
      %s22 = ssub.s32 1024, 1024
      %23 = vsyncadd [#allocation6], %s22
      %s25 = sshll.u32 [#allocation5], 4
      %s26 = int_to_ptr.vmem [resolvable:$true] %s25
      %28 = dma.hbm_to_vmem [thread:$0]  %s1, 1024, %s26, [#allocation6]
    $region5: #{tpu_custom_call.1} parent=1 // pred_fallthru
      _
    // Predicated region
    $region6: #{tpu_custom_call.1} parent=1 // pred_check
      _
    $region7: #{tpu_custom_call.1} parent=1 // pred_check_branch
      %30 = sbr.rel (0) target = $region9
    $region8: #{tpu_custom_call.1} parent=1 // pred_region
      %s32 = ssub.s32 16384, 16384
      %33 = vsyncadd [#allocation9], %s32
      %s34 = sshll.u32 [#allocation8], 4
      %s35 = int_to_ptr.vmem [resolvable:$true] %s34
      %40 = dma.hbm_to_vmem [thread:$0]  %s2, 16384, %s35, [#allocation9], 128, 128, 8
    $region9: #{tpu_custom_call.1} parent=1 // pred_fallthru
      _
    // Predicated region
    $region10: #{tpu_custom_call.1} parent=1 // pred_check
      _
    $region11: #{tpu_custom_call.1} parent=1 // pred_check_branch
      %42 = sbr.rel (0) target = $region13
    $region12: #{tpu_custom_call.1} parent=1 // pred_region
      %s44 = ssub.s32 3328, 3328
      %45 = vsyncadd [#allocation9], %s44
      %s46 = sshll.u32 [#allocation10], 4
      %s47 = int_to_ptr.vmem [resolvable:$true] %s46
      %52 = dma.hbm_to_vmem [thread:$0]  %s3, 3328, %s47, [#allocation9], 256, 256, 16
    $region13: #{tpu_custom_call.1} parent=1 // pred_fallthru
      _
    // Predicated region
    $region14: #{tpu_custom_call.1} parent=1 // pred_check
      _
    $region15: #{tpu_custom_call.1} parent=1 // pred_check_branch
      %54 = sbr.rel (0) target = $region17
    $region16: #{tpu_custom_call.1} parent=1 // pred_region
      %s56 = ssub.s32 16384, 16384
      %57 = vsyncadd [#allocation12], %s56
      %s58 = sshll.u32 [#allocation11], 4
      %s59 = int_to_ptr.vmem [resolvable:$true] %s58
      %64 = dma.hbm_to_vmem [thread:$0]  %s4, 16384, %s59, [#allocation12], 512, 512, 32
    $region17: #{tpu_custom_call.1} parent=1 // pred_fallthru
      _
    // Predicated region
    $region18: #{tpu_custom_call.1} parent=1 // pred_check
      _
    $region19: #{tpu_custom_call.1} parent=1 // pred_check_branch
      %66 = sbr.rel (0) target = $region21
    $region20: #{tpu_custom_call.1} parent=1 // pred_region
      _
    $region21: #{tpu_custom_call.1} parent=1 // pred_fallthru
      _
    // Predicated region
    $region22: #{tpu_custom_call.1} parent=1 // pred_check
      _
    $region23: #{tpu_custom_call.1} parent=1 // pred_check_branch
      %68 = sbr.rel (0) target = $region25
    $region24: #{tpu_custom_call.1} parent=1 // pred_region
      %69 = dma.done [#allocation6], 1024
    $region25: #{tpu_custom_call.1} parent=1 // pred_fallthru
      _
    // Predicated region
    $region26: #{tpu_custom_call.1} parent=1 // pred_check
      _
    $region27: #{tpu_custom_call.1} parent=1 // pred_check_branch
      %71 = sbr.rel (0) target = $region29
    $region28: #{tpu_custom_call.1} parent=1 // pred_region
      %72 = dma.done [#allocation9], 16384
    $region29: #{tpu_custom_call.1} parent=1 // pred_fallthru
      _
    // Predicated region
    $region30: #{tpu_custom_call.1} parent=1 // pred_check
      _
    $region31: #{tpu_custom_call.1} parent=1 // pred_check_branch
      %74 = sbr.rel (0) target = $region33
    $region32: #{tpu_custom_call.1} parent=1 // pred_region
      %75 = dma.done [#allocation9], 3328
    $region33: #{tpu_custom_call.1} parent=1 // pred_fallthru
      _
    // Predicated region
    $region34: #{tpu_custom_call.1} parent=1 // pred_check
      _
    $region35: #{tpu_custom_call.1} parent=1 // pred_check_branch
      %77 = sbr.rel (0) target = $region37
    $region36: #{tpu_custom_call.1} parent=1 // pred_region
      %78 = dma.done [#allocation12], 16384
    $region37: #{tpu_custom_call.1} parent=1 // pred_fallthru
      _
    %v79 = vld [vmem:[#allocation5] sm:$0xff]
    %v80 = vld [vmem:[#allocation5 + $0x8] sm:$0xff]
    %v81 = vld [vmem:[#allocation5 + $0x10] sm:$0xff]
    %v82 = vld [vmem:[#allocation5 + $0x18] sm:$0xff]
    %v83 = vld [vmem:[#allocation5 + $0x20] sm:$0xff]
    %v84 = vld [vmem:[#allocation5 + $0x28] sm:$0xff]
    %v85 = vld [vmem:[#allocation5 + $0x30] sm:$0xff]
    %v86 = vld [vmem:[#allocation5 + $0x38] sm:$0xff]
    %v87 = vpack.c.bf16 %v79, %v79
    %v88 = vpack.c.bf16 %v80, %v80
    %v89 = vpack.c.bf16 %v81, %v81
    %v90 = vpack.c.bf16 %v82, %v82
    %v91 = vpack.c.bf16 %v83, %v83
    %v92 = vpack.c.bf16 %v84, %v84
    %v93 = vpack.c.bf16 %v85, %v85
    %v94 = vpack.c.bf16 %v86, %v86
    %v95 = vld [vmem:[#allocation8] sm:$0xff]
    %v96 = vld [vmem:[#allocation8 + $0x8] sm:$0xff]
    %v97 = vld [vmem:[#allocation8 + $0x10] sm:$0xff]
    %v98 = vld [vmem:[#allocation8 + $0x18] sm:$0xff]
    %v99 = vld [vmem:[#allocation8 + $0x20] sm:$0xff]
    %v100 = vld [vmem:[#allocation8 + $0x28] sm:$0xff]
    %v101 = vld [vmem:[#allocation8 + $0x30] sm:$0xff]
    %v102 = vld [vmem:[#allocation8 + $0x38] sm:$0xff]
    %v103 = vld [vmem:[#allocation8 + $0x40] sm:$0xff]
    %v104 = vld [vmem:[#allocation8 + $0x48] sm:$0xff]
    %v105 = vld [vmem:[#allocation8 + $0x50] sm:$0xff]
    %v106 = vld [vmem:[#allocation8 + $0x58] sm:$0xff]
    %v107 = vld [vmem:[#allocation8 + $0x60] sm:$0xff]
    %v108 = vld [vmem:[#allocation8 + $0x68] sm:$0xff]
    %v109 = vld [vmem:[#allocation8 + $0x70] sm:$0xff]
    %v110 = vld [vmem:[#allocation8 + $0x78] sm:$0xff]
    %v111 = vld [vmem:[#allocation8 + $0x80] sm:$0xff]
    %v112 = vld [vmem:[#allocation8 + $0x88] sm:$0xff]
    %v113 = vld [vmem:[#allocation8 + $0x90] sm:$0xff]
    %v114 = vld [vmem:[#allocation8 + $0x98] sm:$0xff]
    %v115 = vld [vmem:[#allocation8 + $0xa0] sm:$0xff]
    %v116 = vld [vmem:[#allocation8 + $0xa8] sm:$0xff]
    %v117 = vld [vmem:[#allocation8 + $0xb0] sm:$0xff]
    %v118 = vld [vmem:[#allocation8 + $0xb8] sm:$0xff]
    %v119 = vld [vmem:[#allocation8 + $0xc0] sm:$0xff]
    %v120 = vld [vmem:[#allocation8 + $0xc8] sm:$0xff]
    %v121 = vld [vmem:[#allocation8 + $0xd0] sm:$0xff]
    %v122 = vld [vmem:[#allocation8 + $0xd8] sm:$0xff]
    %v123 = vld [vmem:[#allocation8 + $0xe0] sm:$0xff]
    %v124 = vld [vmem:[#allocation8 + $0xe8] sm:$0xff]
    %v125 = vld [vmem:[#allocation8 + $0xf0] sm:$0xff]
    %v126 = vld [vmem:[#allocation8 + $0xf8] sm:$0xff]
    %v127 = vld [vmem:[#allocation8 + $0x100] sm:$0xff]
    %v128 = vld [vmem:[#allocation8 + $0x108] sm:$0xff]
    %v129 = vld [vmem:[#allocation8 + $0x110] sm:$0xff]
    %v130 = vld [vmem:[#allocation8 + $0x118] sm:$0xff]
    %v131 = vld [vmem:[#allocation8 + $0x120] sm:$0xff]
    %v132 = vld [vmem:[#allocation8 + $0x128] sm:$0xff]
    %v133 = vld [vmem:[#allocation8 + $0x130] sm:$0xff]
    %v134 = vld [vmem:[#allocation8 + $0x138] sm:$0xff]
    %v135 = vld [vmem:[#allocation8 + $0x140] sm:$0xff]
    %v136 = vld [vmem:[#allocation8 + $0x148] sm:$0xff]
    %v137 = vld [vmem:[#allocation8 + $0x150] sm:$0xff]
    %v138 = vld [vmem:[#allocation8 + $0x158] sm:$0xff]
    %v139 = vld [vmem:[#allocation8 + $0x160] sm:$0xff]
    %v140 = vld [vmem:[#allocation8 + $0x168] sm:$0xff]
    %v141 = vld [vmem:[#allocation8 + $0x170] sm:$0xff]
    %v142 = vld [vmem:[#allocation8 + $0x178] sm:$0xff]
    %v143 = vld [vmem:[#allocation8 + $0x180] sm:$0xff]
    %v144 = vld [vmem:[#allocation8 + $0x188] sm:$0xff]
    %v145 = vld [vmem:[#allocation8 + $0x190] sm:$0xff]
    %v146 = vld [vmem:[#allocation8 + $0x198] sm:$0xff]
    %v147 = vld [vmem:[#allocation8 + $0x1a0] sm:$0xff]
    %v148 = vld [vmem:[#allocation8 + $0x1a8] sm:$0xff]
    %v149 = vld [vmem:[#allocation8 + $0x1b0] sm:$0xff]
    %v150 = vld [vmem:[#allocation8 + $0x1b8] sm:$0xff]
    %v151 = vld [vmem:[#allocation8 + $0x1c0] sm:$0xff]
    %v152 = vld [vmem:[#allocation8 + $0x1c8] sm:$0xff]
    %v153 = vld [vmem:[#allocation8 + $0x1d0] sm:$0xff]
    %v154 = vld [vmem:[#allocation8 + $0x1d8] sm:$0xff]
    %v155 = vld [vmem:[#allocation8 + $0x1e0] sm:$0xff]
    %v156 = vld [vmem:[#allocation8 + $0x1e8] sm:$0xff]
    %v157 = vld [vmem:[#allocation8 + $0x1f0] sm:$0xff]
    %v158 = vld [vmem:[#allocation8 + $0x1f8] sm:$0xff]
    %v159 = vld [vmem:[#allocation8 + $0x200] sm:$0xff]
    %v160 = vld [vmem:[#allocation8 + $0x208] sm:$0xff]
    %v161 = vld [vmem:[#allocation8 + $0x210] sm:$0xff]
    %v162 = vld [vmem:[#allocation8 + $0x218] sm:$0xff]
    %v163 = vld [vmem:[#allocation8 + $0x220] sm:$0xff]
    %v164 = vld [vmem:[#allocation8 + $0x228] sm:$0xff]
    %v165 = vld [vmem:[#allocation8 + $0x230] sm:$0xff]
    %v166 = vld [vmem:[#allocation8 + $0x238] sm:$0xff]
    %v167 = vld [vmem:[#allocation8 + $0x240] sm:$0xff]
    %v168 = vld [vmem:[#allocation8 + $0x248] sm:$0xff]
    %v169 = vld [vmem:[#allocation8 + $0x250] sm:$0xff]
    %v170 = vld [vmem:[#allocation8 + $0x258] sm:$0xff]
    %v171 = vld [vmem:[#allocation8 + $0x260] sm:$0xff]
    %v172 = vld [vmem:[#allocation8 + $0x268] sm:$0xff]
    %v173 = vld [vmem:[#allocation8 + $0x270] sm:$0xff]
    %v174 = vld [vmem:[#allocation8 + $0x278] sm:$0xff]
    %v175 = vld [vmem:[#allocation8 + $0x280] sm:$0xff]
    %v176 = vld [vmem:[#allocation8 + $0x288] sm:$0xff]
    %v177 = vld [vmem:[#allocation8 + $0x290] sm:$0xff]
    %v178 = vld [vmem:[#allocation8 + $0x298] sm:$0xff]
    %v179 = vld [vmem:[#allocation8 + $0x2a0] sm:$0xff]
    %v180 = vld [vmem:[#allocation8 + $0x2a8] sm:$0xff]
    %v181 = vld [vmem:[#allocation8 + $0x2b0] sm:$0xff]
    %v182 = vld [vmem:[#allocation8 + $0x2b8] sm:$0xff]
    %v183 = vld [vmem:[#allocation8 + $0x2c0] sm:$0xff]
    %v184 = vld [vmem:[#allocation8 + $0x2c8] sm:$0xff]
    %v185 = vld [vmem:[#allocation8 + $0x2d0] sm:$0xff]
    %v186 = vld [vmem:[#allocation8 + $0x2d8] sm:$0xff]
    %v187 = vld [vmem:[#allocation8 + $0x2e0] sm:$0xff]
    %v188 = vld [vmem:[#allocation8 + $0x2e8] sm:$0xff]
    %v189 = vld [vmem:[#allocation8 + $0x2f0] sm:$0xff]
    %v190 = vld [vmem:[#allocation8 + $0x2f8] sm:$0xff]
    %v191 = vld [vmem:[#allocation8 + $0x300] sm:$0xff]
    %v192 = vld [vmem:[#allocation8 + $0x308] sm:$0xff]
    %v193 = vld [vmem:[#allocation8 + $0x310] sm:$0xff]
    %v194 = vld [vmem:[#allocation8 + $0x318] sm:$0xff]
    %v195 = vld [vmem:[#allocation8 + $0x320] sm:$0xff]
    %v196 = vld [vmem:[#allocation8 + $0x328] sm:$0xff]
    %v197 = vld [vmem:[#allocation8 + $0x330] sm:$0xff]
    %v198 = vld [vmem:[#allocation8 + $0x338] sm:$0xff]
    %v199 = vld [vmem:[#allocation8 + $0x340] sm:$0xff]
    %v200 = vld [vmem:[#allocation8 + $0x348] sm:$0xff]
    %v201 = vld [vmem:[#allocation8 + $0x350] sm:$0xff]
    %v202 = vld [vmem:[#allocation8 + $0x358] sm:$0xff]
    %v203 = vld [vmem:[#allocation8 + $0x360] sm:$0xff]
    %v204 = vld [vmem:[#allocation8 + $0x368] sm:$0xff]
    %v205 = vld [vmem:[#allocation8 + $0x370] sm:$0xff]
    %v206 = vld [vmem:[#allocation8 + $0x378] sm:$0xff]
    %v207 = vld [vmem:[#allocation8 + $0x380] sm:$0xff]
    %v208 = vld [vmem:[#allocation8 + $0x388] sm:$0xff]
    %v209 = vld [vmem:[#allocation8 + $0x390] sm:$0xff]
    %v210 = vld [vmem:[#allocation8 + $0x398] sm:$0xff]
    %v211 = vld [vmem:[#allocation8 + $0x3a0] sm:$0xff]
    %v212 = vld [vmem:[#allocation8 + $0x3a8] sm:$0xff]
    %v213 = vld [vmem:[#allocation8 + $0x3b0] sm:$0xff]
    %v214 = vld [vmem:[#allocation8 + $0x3b8] sm:$0xff]
    %v215 = vld [vmem:[#allocation8 + $0x3c0] sm:$0xff]
    %v216 = vld [vmem:[#allocation8 + $0x3c8] sm:$0xff]
    %v217 = vld [vmem:[#allocation8 + $0x3d0] sm:$0xff]
    %v218 = vld [vmem:[#allocation8 + $0x3d8] sm:$0xff]
    %v219 = vld [vmem:[#allocation8 + $0x3e0] sm:$0xff]
    %v220 = vld [vmem:[#allocation8 + $0x3e8] sm:$0xff]
    %v221 = vld [vmem:[#allocation8 + $0x3f0] sm:$0xff]
    %v222 = vld [vmem:[#allocation8 + $0x3f8] sm:$0xff]
    %s223 = sld [smem:[#allocation4]]
    %s224 = sshra.s32 %s223, 3
    %s225 = sand.u32 %s223, 7
    %s226 = sshra.s32 %s223, 3
    %s227 = sand.u32 %s223, 7
    %s228 = smul.u32 %s224, 2
    %s229 = smul.u32 %s228, 8
    %s230 = sadd.s32 %s229, %s227
    %s231 = scalar_lea.vmem [#allocation10], %s230
    %v232 = vld [vmem:[%s231] ss:$8 sm:$0x3]
    %v233 = vlaneseq
    %vm234 = vcmp.ge.s32.totalorder %v233, 0
    %vm235 = vcmp.lt.s32.totalorder %v233, 256
    %vm236 = vmand %vm234, %vm235
    %237 = vst.msk [vmem:[#allocation2] ss:$8 sm:$0x3] %vm236, %v232
    %238 = vst.msk [vmem:[#allocation2] ss:$8 sm:$0x0] %vm236, %v232
    %s239 = sld [smem:[#allocation4 + $0x1]]
    %s240 = sshra.s32 %s239, 3
    %s241 = sand.u32 %s239, 7
    %s242 = sshra.s32 %s239, 3
    %s243 = sand.u32 %s239, 7
    %s244 = smul.u32 %s240, 2
    %s245 = smul.u32 %s244, 8
    %s246 = sadd.s32 %s245, %s243
    %s247 = scalar_lea.vmem [#allocation10], %s246
    %v248 = vld [vmem:[%s247] ss:$8 sm:$0x3]
    %s249 = scalar_lea.vmem [#allocation2], 1
    %250 = vst.msk [vmem:[%s249] ss:$8 sm:$0x3] %vm236, %v248
    %251 = vst.msk [vmem:[%s249] ss:$8 sm:$0x0] %vm236, %v248
    %s252 = sld [smem:[#allocation4 + $0x2]]
    %s253 = sshra.s32 %s252, 3
    %s254 = sand.u32 %s252, 7
    %s255 = sshra.s32 %s252, 3
    %s256 = sand.u32 %s252, 7
    %s257 = smul.u32 %s253, 2
    %s258 = smul.u32 %s257, 8
    %s259 = sadd.s32 %s258, %s256
    %s260 = scalar_lea.vmem [#allocation10], %s259
    %v261 = vld [vmem:[%s260] ss:$8 sm:$0x3]
    %s262 = scalar_lea.vmem [#allocation2], 2
    %263 = vst.msk [vmem:[%s262] ss:$8 sm:$0x3] %vm236, %v261
    %264 = vst.msk [vmem:[%s262] ss:$8 sm:$0x0] %vm236, %v261
    %s265 = sld [smem:[#allocation4 + $0x3]]
    %s266 = sshra.s32 %s265, 3
    %s267 = sand.u32 %s265, 7
    %s268 = sshra.s32 %s265, 3
    %s269 = sand.u32 %s265, 7
    %s270 = smul.u32 %s266, 2
    %s271 = smul.u32 %s270, 8
    %s272 = sadd.s32 %s271, %s269
    %s273 = scalar_lea.vmem [#allocation10], %s272
    %v274 = vld [vmem:[%s273] ss:$8 sm:$0x3]
    %s275 = scalar_lea.vmem [#allocation2], 3
    %276 = vst.msk [vmem:[%s275] ss:$8 sm:$0x3] %vm236, %v274
    %277 = vst.msk [vmem:[%s275] ss:$8 sm:$0x0] %vm236, %v274
    %s278 = sld [smem:[#allocation4 + $0x4]]
    %s279 = sshra.s32 %s278, 3
    %s280 = sand.u32 %s278, 7
    %s281 = sshra.s32 %s278, 3
    %s282 = sand.u32 %s278, 7
    %s283 = smul.u32 %s279, 2
    %s284 = smul.u32 %s283, 8
    %s285 = sadd.s32 %s284, %s282
    %s286 = scalar_lea.vmem [#allocation10], %s285
    %v287 = vld [vmem:[%s286] ss:$8 sm:$0x3]
    %s288 = scalar_lea.vmem [#allocation2], 4
    %289 = vst.msk [vmem:[%s288] ss:$8 sm:$0x3] %vm236, %v287
    %290 = vst.msk [vmem:[%s288] ss:$8 sm:$0x0] %vm236, %v287
    %s291 = sld [smem:[#allocation4 + $0x5]]
    %s292 = sshra.s32 %s291, 3
    %s293 = sand.u32 %s291, 7
    %s294 = sshra.s32 %s291, 3
    %s295 = sand.u32 %s291, 7
    %s296 = smul.u32 %s292, 2
    %s297 = smul.u32 %s296, 8
    %s298 = sadd.s32 %s297, %s295
    %s299 = scalar_lea.vmem [#allocation10], %s298
    %v300 = vld [vmem:[%s299] ss:$8 sm:$0x3]
    %s301 = scalar_lea.vmem [#allocation2], 5
    %302 = vst.msk [vmem:[%s301] ss:$8 sm:$0x3] %vm236, %v300
    %303 = vst.msk [vmem:[%s301] ss:$8 sm:$0x0] %vm236, %v300
    %s304 = sld [smem:[#allocation4 + $0x6]]
    %s305 = sshra.s32 %s304, 3
    %s306 = sand.u32 %s304, 7
    %s307 = sshra.s32 %s304, 3
    %s308 = sand.u32 %s304, 7
    %s309 = smul.u32 %s305, 2
    %s310 = smul.u32 %s309, 8
    %s311 = sadd.s32 %s310, %s308
    %s312 = scalar_lea.vmem [#allocation10], %s311
    %v313 = vld [vmem:[%s312] ss:$8 sm:$0x3]
    %s314 = scalar_lea.vmem [#allocation2], 6
    %315 = vst.msk [vmem:[%s314] ss:$8 sm:$0x3] %vm236, %v313
    %316 = vst.msk [vmem:[%s314] ss:$8 sm:$0x0] %vm236, %v313
    %s317 = sld [smem:[#allocation4 + $0x7]]
    %s318 = sshra.s32 %s317, 3
    %s319 = sand.u32 %s317, 7
    %s320 = sshra.s32 %s317, 3
    %s321 = sand.u32 %s317, 7
    %s322 = smul.u32 %s318, 2
    %s323 = smul.u32 %s322, 8
    %s324 = sadd.s32 %s323, %s321
    %s325 = scalar_lea.vmem [#allocation10], %s324
    %v326 = vld [vmem:[%s325] ss:$8 sm:$0x3]
    %s327 = scalar_lea.vmem [#allocation2], 7
    %328 = vst.msk [vmem:[%s327] ss:$8 sm:$0x3] %vm236, %v326
    %329 = vst.msk [vmem:[%s327] ss:$8 sm:$0x0] %vm236, %v326
    %v330 = vld [vmem:[#allocation2] sm:$0xff]
    %v331 = vld [vmem:[#allocation2 + $0x8] sm:$0xff]
    %v460 = vunpack.c.l.b16 %v95
    %v461 = vunpack.c.h.b16 %v95
    %v462 = vunpack.c.l.b16 %v96
    %v463 = vunpack.c.h.b16 %v96
    %v464 = vunpack.c.l.b16 %v97
    %v465 = vunpack.c.h.b16 %v97
    %v466 = vunpack.c.l.b16 %v98
    %v467 = vunpack.c.h.b16 %v98
    %v468 = vunpack.c.l.b16 %v99
    %v469 = vunpack.c.h.b16 %v99
    %v470 = vunpack.c.l.b16 %v100
    %v471 = vunpack.c.h.b16 %v100
    %v472 = vunpack.c.l.b16 %v101
    %v473 = vunpack.c.h.b16 %v101
    %v474 = vunpack.c.l.b16 %v102
    %v475 = vunpack.c.h.b16 %v102
    %v476 = vunpack.c.l.b16 %v103
    %v477 = vunpack.c.h.b16 %v103
    %v478 = vunpack.c.l.b16 %v104
    %v479 = vunpack.c.h.b16 %v104
    %v480 = vunpack.c.l.b16 %v105
    %v481 = vunpack.c.h.b16 %v105
    %v482 = vunpack.c.l.b16 %v106
    %v483 = vunpack.c.h.b16 %v106
    %v484 = vunpack.c.l.b16 %v107
    %v485 = vunpack.c.h.b16 %v107
    %v486 = vunpack.c.l.b16 %v108
    %v487 = vunpack.c.h.b16 %v108
    %v488 = vunpack.c.l.b16 %v109
    %v489 = vunpack.c.h.b16 %v109
    %v490 = vunpack.c.l.b16 %v110
    %v491 = vunpack.c.h.b16 %v110
    %v492 = vunpack.c.l.b16 %v111
    %v493 = vunpack.c.h.b16 %v111
    %v494 = vunpack.c.l.b16 %v112
    %v495 = vunpack.c.h.b16 %v112
    %v496 = vunpack.c.l.b16 %v113
    %v497 = vunpack.c.h.b16 %v113
    %v498 = vunpack.c.l.b16 %v114
    %v499 = vunpack.c.h.b16 %v114
    %v500 = vunpack.c.l.b16 %v115
    %v501 = vunpack.c.h.b16 %v115
    %v502 = vunpack.c.l.b16 %v116
    %v503 = vunpack.c.h.b16 %v116
    %v504 = vunpack.c.l.b16 %v117
    %v505 = vunpack.c.h.b16 %v117
    %v506 = vunpack.c.l.b16 %v118
    %v507 = vunpack.c.h.b16 %v118
    %v508 = vunpack.c.l.b16 %v119
    %v509 = vunpack.c.h.b16 %v119
    %v510 = vunpack.c.l.b16 %v120
    %v511 = vunpack.c.h.b16 %v120
    %v512 = vunpack.c.l.b16 %v121
    %v513 = vunpack.c.h.b16 %v121
    %v514 = vunpack.c.l.b16 %v122
    %v515 = vunpack.c.h.b16 %v122
    %v516 = vunpack.c.l.b16 %v123
    %v517 = vunpack.c.h.b16 %v123
    %v518 = vunpack.c.l.b16 %v124
    %v519 = vunpack.c.h.b16 %v124
    %v520 = vunpack.c.l.b16 %v125
    %v521 = vunpack.c.h.b16 %v125
    %v522 = vunpack.c.l.b16 %v126
    %v523 = vunpack.c.h.b16 %v126
    %v524 = vunpack.c.l.b16 %v127
    %v525 = vunpack.c.h.b16 %v127
    %v526 = vunpack.c.l.b16 %v128
    %v527 = vunpack.c.h.b16 %v128
    %v528 = vunpack.c.l.b16 %v129
    %v529 = vunpack.c.h.b16 %v129
    %v530 = vunpack.c.l.b16 %v130
    %v531 = vunpack.c.h.b16 %v130
    %v532 = vunpack.c.l.b16 %v131
    %v533 = vunpack.c.h.b16 %v131
    %v534 = vunpack.c.l.b16 %v132
    %v535 = vunpack.c.h.b16 %v132
    %v536 = vunpack.c.l.b16 %v133
    %v537 = vunpack.c.h.b16 %v133
    %v538 = vunpack.c.l.b16 %v134
    %v539 = vunpack.c.h.b16 %v134
    %v540 = vunpack.c.l.b16 %v135
    %v541 = vunpack.c.h.b16 %v135
    %v542 = vunpack.c.l.b16 %v136
    %v543 = vunpack.c.h.b16 %v136
    %v544 = vunpack.c.l.b16 %v137
    %v545 = vunpack.c.h.b16 %v137
    %v546 = vunpack.c.l.b16 %v138
    %v547 = vunpack.c.h.b16 %v138
    %v548 = vunpack.c.l.b16 %v139
    %v549 = vunpack.c.h.b16 %v139
    %v550 = vunpack.c.l.b16 %v140
    %v551 = vunpack.c.h.b16 %v140
    %v552 = vunpack.c.l.b16 %v141
    %v553 = vunpack.c.h.b16 %v141
    %v554 = vunpack.c.l.b16 %v142
    %v555 = vunpack.c.h.b16 %v142
    %v556 = vunpack.c.l.b16 %v143
    %v557 = vunpack.c.h.b16 %v143
    %v558 = vunpack.c.l.b16 %v144
    %v559 = vunpack.c.h.b16 %v144
    %v560 = vunpack.c.l.b16 %v145
    %v561 = vunpack.c.h.b16 %v145
    %v562 = vunpack.c.l.b16 %v146
    %v563 = vunpack.c.h.b16 %v146
    %v564 = vunpack.c.l.b16 %v147
    %v565 = vunpack.c.h.b16 %v147
    %v566 = vunpack.c.l.b16 %v148
    %v567 = vunpack.c.h.b16 %v148
    %v568 = vunpack.c.l.b16 %v149
    %v569 = vunpack.c.h.b16 %v149
    %v570 = vunpack.c.l.b16 %v150
    %v571 = vunpack.c.h.b16 %v150
    %v572 = vunpack.c.l.b16 %v151
    %v573 = vunpack.c.h.b16 %v151
    %v574 = vunpack.c.l.b16 %v152
    %v575 = vunpack.c.h.b16 %v152
    %v576 = vunpack.c.l.b16 %v153
    %v577 = vunpack.c.h.b16 %v153
    %v578 = vunpack.c.l.b16 %v154
    %v579 = vunpack.c.h.b16 %v154
    %v580 = vunpack.c.l.b16 %v155
    %v581 = vunpack.c.h.b16 %v155
    %v582 = vunpack.c.l.b16 %v156
    %v583 = vunpack.c.h.b16 %v156
    %v584 = vunpack.c.l.b16 %v157
    %v585 = vunpack.c.h.b16 %v157
    %v586 = vunpack.c.l.b16 %v158
    %v587 = vunpack.c.h.b16 %v158
    %v588 = vunpack.c.l.b16 %v159
    %v589 = vunpack.c.h.b16 %v159
    %v590 = vunpack.c.l.b16 %v160
    %v591 = vunpack.c.h.b16 %v160
    %v592 = vunpack.c.l.b16 %v161
    %v593 = vunpack.c.h.b16 %v161
    %v594 = vunpack.c.l.b16 %v162
    %v595 = vunpack.c.h.b16 %v162
    %v596 = vunpack.c.l.b16 %v163
    %v597 = vunpack.c.h.b16 %v163
    %v598 = vunpack.c.l.b16 %v164
    %v599 = vunpack.c.h.b16 %v164
    %v600 = vunpack.c.l.b16 %v165
    %v601 = vunpack.c.h.b16 %v165
    %v602 = vunpack.c.l.b16 %v166
    %v603 = vunpack.c.h.b16 %v166
    %v604 = vunpack.c.l.b16 %v167
    %v605 = vunpack.c.h.b16 %v167
    %v606 = vunpack.c.l.b16 %v168
    %v607 = vunpack.c.h.b16 %v168
    %v608 = vunpack.c.l.b16 %v169
    %v609 = vunpack.c.h.b16 %v169
    %v610 = vunpack.c.l.b16 %v170
    %v611 = vunpack.c.h.b16 %v170
    %v612 = vunpack.c.l.b16 %v171
    %v613 = vunpack.c.h.b16 %v171
    %v614 = vunpack.c.l.b16 %v172
    %v615 = vunpack.c.h.b16 %v172
    %v616 = vunpack.c.l.b16 %v173
    %v617 = vunpack.c.h.b16 %v173
    %v618 = vunpack.c.l.b16 %v174
    %v619 = vunpack.c.h.b16 %v174
    %v620 = vunpack.c.l.b16 %v175
    %v621 = vunpack.c.h.b16 %v175
    %v622 = vunpack.c.l.b16 %v176
    %v623 = vunpack.c.h.b16 %v176
    %v624 = vunpack.c.l.b16 %v177
    %v625 = vunpack.c.h.b16 %v177
    %v626 = vunpack.c.l.b16 %v178
    %v627 = vunpack.c.h.b16 %v178
    %v628 = vunpack.c.l.b16 %v179
    %v629 = vunpack.c.h.b16 %v179
    %v630 = vunpack.c.l.b16 %v180
    %v631 = vunpack.c.h.b16 %v180
    %v632 = vunpack.c.l.b16 %v181
    %v633 = vunpack.c.h.b16 %v181
    %v634 = vunpack.c.l.b16 %v182
    %v635 = vunpack.c.h.b16 %v182
    %v636 = vunpack.c.l.b16 %v183
    %v637 = vunpack.c.h.b16 %v183
    %v638 = vunpack.c.l.b16 %v184
    %v639 = vunpack.c.h.b16 %v184
    %v640 = vunpack.c.l.b16 %v185
    %v641 = vunpack.c.h.b16 %v185
    %v642 = vunpack.c.l.b16 %v186
    %v643 = vunpack.c.h.b16 %v186
    %v644 = vunpack.c.l.b16 %v187
    %v645 = vunpack.c.h.b16 %v187
    %v646 = vunpack.c.l.b16 %v188
    %v647 = vunpack.c.h.b16 %v188
    %v648 = vunpack.c.l.b16 %v189
    %v649 = vunpack.c.h.b16 %v189
    %v650 = vunpack.c.l.b16 %v190
    %v651 = vunpack.c.h.b16 %v190
    %v652 = vunpack.c.l.b16 %v191
    %v653 = vunpack.c.h.b16 %v191
    %v654 = vunpack.c.l.b16 %v192
    %v655 = vunpack.c.h.b16 %v192
    %v656 = vunpack.c.l.b16 %v193
    %v657 = vunpack.c.h.b16 %v193
    %v658 = vunpack.c.l.b16 %v194
    %v659 = vunpack.c.h.b16 %v194
    %v660 = vunpack.c.l.b16 %v195
    %v661 = vunpack.c.h.b16 %v195
    %v662 = vunpack.c.l.b16 %v196
    %v663 = vunpack.c.h.b16 %v196
    %v664 = vunpack.c.l.b16 %v197
    %v665 = vunpack.c.h.b16 %v197
    %v666 = vunpack.c.l.b16 %v198
    %v667 = vunpack.c.h.b16 %v198
    %v668 = vunpack.c.l.b16 %v199
    %v669 = vunpack.c.h.b16 %v199
    %v670 = vunpack.c.l.b16 %v200
    %v671 = vunpack.c.h.b16 %v200
    %v672 = vunpack.c.l.b16 %v201
    %v673 = vunpack.c.h.b16 %v201
    %v674 = vunpack.c.l.b16 %v202
    %v675 = vunpack.c.h.b16 %v202
    %v676 = vunpack.c.l.b16 %v203
    %v677 = vunpack.c.h.b16 %v203
    %v678 = vunpack.c.l.b16 %v204
    %v679 = vunpack.c.h.b16 %v204
    %v680 = vunpack.c.l.b16 %v205
    %v681 = vunpack.c.h.b16 %v205
    %v682 = vunpack.c.l.b16 %v206
    %v683 = vunpack.c.h.b16 %v206
    %v684 = vunpack.c.l.b16 %v207
    %v685 = vunpack.c.h.b16 %v207
    %v686 = vunpack.c.l.b16 %v208
    %v687 = vunpack.c.h.b16 %v208
    %v688 = vunpack.c.l.b16 %v209
    %v689 = vunpack.c.h.b16 %v209
    %v690 = vunpack.c.l.b16 %v210
    %v691 = vunpack.c.h.b16 %v210
    %v692 = vunpack.c.l.b16 %v211
    %v693 = vunpack.c.h.b16 %v211
    %v694 = vunpack.c.l.b16 %v212
    %v695 = vunpack.c.h.b16 %v212
    %v696 = vunpack.c.l.b16 %v213
    %v697 = vunpack.c.h.b16 %v213
    %v698 = vunpack.c.l.b16 %v214
    %v699 = vunpack.c.h.b16 %v214
    %v700 = vunpack.c.l.b16 %v215
    %v701 = vunpack.c.h.b16 %v215
    %v702 = vunpack.c.l.b16 %v216
    %v703 = vunpack.c.h.b16 %v216
    %v704 = vunpack.c.l.b16 %v217
    %v705 = vunpack.c.h.b16 %v217
    %v706 = vunpack.c.l.b16 %v218
    %v707 = vunpack.c.h.b16 %v218
    %v708 = vunpack.c.l.b16 %v219
    %v709 = vunpack.c.h.b16 %v219
    %v710 = vunpack.c.l.b16 %v220
    %v711 = vunpack.c.h.b16 %v220
    %v712 = vunpack.c.l.b16 %v221
    %v713 = vunpack.c.h.b16 %v221
    %v714 = vunpack.c.l.b16 %v222
    %v715 = vunpack.c.h.b16 %v222
    %v716 = vpack.c.b16 %v462, %v460
    %v717 = vpack.c.b16 %v463, %v461
    %v718 = vpack.c.b16 %v466, %v464
    %v719 = vpack.c.b16 %v467, %v465
    %v720 = vpack.c.b16 %v470, %v468
    %v721 = vpack.c.b16 %v471, %v469
    %v722 = vpack.c.b16 %v474, %v472
    %v723 = vpack.c.b16 %v475, %v473
    %v724 = vpack.c.b16 %v478, %v476
    %v725 = vpack.c.b16 %v479, %v477
    %v726 = vpack.c.b16 %v482, %v480
    %v727 = vpack.c.b16 %v483, %v481
    %v728 = vpack.c.b16 %v486, %v484
    %v729 = vpack.c.b16 %v487, %v485
    %v730 = vpack.c.b16 %v490, %v488
    %v731 = vpack.c.b16 %v491, %v489
    %v732 = vpack.c.b16 %v494, %v492
    %v733 = vpack.c.b16 %v495, %v493
    %v734 = vpack.c.b16 %v498, %v496
    %v735 = vpack.c.b16 %v499, %v497
    %v736 = vpack.c.b16 %v502, %v500
    %v737 = vpack.c.b16 %v503, %v501
    %v738 = vpack.c.b16 %v506, %v504
    %v739 = vpack.c.b16 %v507, %v505
    %v740 = vpack.c.b16 %v510, %v508
    %v741 = vpack.c.b16 %v511, %v509
    %v742 = vpack.c.b16 %v514, %v512
    %v743 = vpack.c.b16 %v515, %v513
    %v744 = vpack.c.b16 %v518, %v516
    %v745 = vpack.c.b16 %v519, %v517
    %v746 = vpack.c.b16 %v522, %v520
    %v747 = vpack.c.b16 %v523, %v521
    %v748 = vpack.c.b16 %v526, %v524
    %v749 = vpack.c.b16 %v527, %v525
    %v750 = vpack.c.b16 %v530, %v528
    %v751 = vpack.c.b16 %v531, %v529
    %v752 = vpack.c.b16 %v534, %v532
    %v753 = vpack.c.b16 %v535, %v533
    %v754 = vpack.c.b16 %v538, %v536
    %v755 = vpack.c.b16 %v539, %v537
    %v756 = vpack.c.b16 %v542, %v540
    %v757 = vpack.c.b16 %v543, %v541
    %v758 = vpack.c.b16 %v546, %v544
    %v759 = vpack.c.b16 %v547, %v545
    %v760 = vpack.c.b16 %v550, %v548
    %v761 = vpack.c.b16 %v551, %v549
    %v762 = vpack.c.b16 %v554, %v552
    %v763 = vpack.c.b16 %v555, %v553
    %v764 = vpack.c.b16 %v558, %v556
    %v765 = vpack.c.b16 %v559, %v557
    %v766 = vpack.c.b16 %v562, %v560
    %v767 = vpack.c.b16 %v563, %v561
    %v768 = vpack.c.b16 %v566, %v564
    %v769 = vpack.c.b16 %v567, %v565
    %v770 = vpack.c.b16 %v570, %v568
    %v771 = vpack.c.b16 %v571, %v569
    %v772 = vpack.c.b16 %v574, %v572
    %v773 = vpack.c.b16 %v575, %v573
    %v774 = vpack.c.b16 %v578, %v576
    %v775 = vpack.c.b16 %v579, %v577
    %v776 = vpack.c.b16 %v582, %v580
    %v777 = vpack.c.b16 %v583, %v581
    %v778 = vpack.c.b16 %v586, %v584
    %v779 = vpack.c.b16 %v587, %v585
    %v780 = vpack.c.b16 %v590, %v588
    %v781 = vpack.c.b16 %v591, %v589
    %v782 = vpack.c.b16 %v594, %v592
    %v783 = vpack.c.b16 %v595, %v593
    %v784 = vpack.c.b16 %v598, %v596
    %v785 = vpack.c.b16 %v599, %v597
    %v786 = vpack.c.b16 %v602, %v600
    %v787 = vpack.c.b16 %v603, %v601
    %v788 = vpack.c.b16 %v606, %v604
    %v789 = vpack.c.b16 %v607, %v605
    %v790 = vpack.c.b16 %v610, %v608
    %v791 = vpack.c.b16 %v611, %v609
    %v792 = vpack.c.b16 %v614, %v612
    %v793 = vpack.c.b16 %v615, %v613
    %v794 = vpack.c.b16 %v618, %v616
    %v795 = vpack.c.b16 %v619, %v617
    %v796 = vpack.c.b16 %v622, %v620
    %v797 = vpack.c.b16 %v623, %v621
    %v798 = vpack.c.b16 %v626, %v624
    %v799 = vpack.c.b16 %v627, %v625
    %v800 = vpack.c.b16 %v630, %v628
    %v801 = vpack.c.b16 %v631, %v629
    %v802 = vpack.c.b16 %v634, %v632
    %v803 = vpack.c.b16 %v635, %v633
    %v804 = vpack.c.b16 %v638, %v636
    %v805 = vpack.c.b16 %v639, %v637
    %v806 = vpack.c.b16 %v642, %v640
    %v807 = vpack.c.b16 %v643, %v641
    %v808 = vpack.c.b16 %v646, %v644
    %v809 = vpack.c.b16 %v647, %v645
    %v810 = vpack.c.b16 %v650, %v648
    %v811 = vpack.c.b16 %v651, %v649
    %v812 = vpack.c.b16 %v654, %v652
    %v813 = vpack.c.b16 %v655, %v653
    %v814 = vpack.c.b16 %v658, %v656
    %v815 = vpack.c.b16 %v659, %v657
    %v816 = vpack.c.b16 %v662, %v660
    %v817 = vpack.c.b16 %v663, %v661
    %v818 = vpack.c.b16 %v666, %v664
    %v819 = vpack.c.b16 %v667, %v665
    %v820 = vpack.c.b16 %v670, %v668
    %v821 = vpack.c.b16 %v671, %v669
    %v822 = vpack.c.b16 %v674, %v672
    %v823 = vpack.c.b16 %v675, %v673
    %v824 = vpack.c.b16 %v678, %v676
    %v825 = vpack.c.b16 %v679, %v677
    %v826 = vpack.c.b16 %v682, %v680
    %v827 = vpack.c.b16 %v683, %v681
    %v828 = vpack.c.b16 %v686, %v684
    %v829 = vpack.c.b16 %v687, %v685
    %v830 = vpack.c.b16 %v690, %v688
    %v831 = vpack.c.b16 %v691, %v689
    %v832 = vpack.c.b16 %v694, %v692
    %v833 = vpack.c.b16 %v695, %v693
    %v834 = vpack.c.b16 %v698, %v696
    %v835 = vpack.c.b16 %v699, %v697
    %v836 = vpack.c.b16 %v702, %v700
    %v837 = vpack.c.b16 %v703, %v701
    %v838 = vpack.c.b16 %v706, %v704
    %v839 = vpack.c.b16 %v707, %v705
    %v840 = vpack.c.b16 %v710, %v708
    %v841 = vpack.c.b16 %v711, %v709
    %v842 = vpack.c.b16 %v714, %v712
    %v843 = vpack.c.b16 %v715, %v713
    %972 = vmatprep.subr.bf16.mxu0 %v731
    %973 = vmatpush1.bf16.msra.mxu0 %v730
    %974 = vmatprep.subr.bf16.mxu0 %v729
    %975 = vmatpush1.bf16.msra.mxu0 %v728
    %976 = vmatprep.subr.bf16.mxu0 %v727
    %977 = vmatpush1.bf16.msra.mxu0 %v726
    %978 = vmatprep.subr.bf16.mxu0 %v725
    %979 = vmatpush1.bf16.msra.mxu0 %v724
    %980 = vmatprep.subr.bf16.mxu0 %v723
    %981 = vmatpush1.bf16.msra.mxu0 %v722
    %982 = vmatprep.subr.bf16.mxu0 %v721
    %983 = vmatpush1.bf16.msra.mxu0 %v720
    %984 = vmatprep.subr.bf16.mxu0 %v719
    %985 = vmatpush1.bf16.msra.mxu0 %v718
    %986 = vmatprep.subr.bf16.mxu0 %v717
    %987 = vmatpush1.bf16.msra.mxu0 %v716
    %988 = vmatprep.subr.bf16.mxu0 %v747
    %989 = vmatpush2.bf16.msra.mxu0 %v746
    %990 = vmatprep.subr.bf16.mxu0 %v745
    %991 = vmatpush2.bf16.msra.mxu0 %v744
    %992 = vmatprep.subr.bf16.mxu0 %v743
    %993 = vmatpush2.bf16.msra.mxu0 %v742
    %994 = vmatprep.subr.bf16.mxu0 %v741
    %995 = vmatpush2.bf16.msra.mxu0 %v740
    %996 = vmatprep.subr.bf16.mxu0 %v739
    %997 = vmatpush2.bf16.msra.mxu0 %v738
    %998 = vmatprep.subr.bf16.mxu0 %v737
    %999 = vmatpush2.bf16.msra.mxu0 %v736
    %1000 = vmatprep.subr.bf16.mxu0 %v735
    %1001 = vmatpush2.bf16.msra.mxu0 %v734
    %1002 = vmatprep.subr.bf16.mxu0 %v733
    %1003 = vmatpush2.bf16.msra.mxu0 %v732
    %1004 = vmatprep.mubr.bf16.mxu0 %v88
    %1005 = vmatmul.mubr.bf16.gmra.mxu0 %v87
    %v1006 = vpop.f32.mrf.mxu0
    %v1007 = vadd.f32 %v330, %v1006
    %v1008 = vpop.f32.mrf.mxu0
    %v1009 = vadd.f32 %v331, %v1008
    %v1010 = vpop.f32.mrf.mxu0
    %v1011 = vpop.f32.mrf.mxu0
    %1012 = vdwg.mxu0
    %1013 = vmatprep.subr.bf16.mxu0 %v763
    %1014 = vmatpush1.bf16.msra.mxu0 %v762
    %1015 = vmatprep.subr.bf16.mxu0 %v761
    %1016 = vmatpush1.bf16.msra.mxu0 %v760
    %1017 = vmatprep.subr.bf16.mxu0 %v759
    %1018 = vmatpush1.bf16.msra.mxu0 %v758
    %1019 = vmatprep.subr.bf16.mxu0 %v757
    %1020 = vmatpush1.bf16.msra.mxu0 %v756
    %1021 = vmatprep.subr.bf16.mxu0 %v755
    %1022 = vmatpush1.bf16.msra.mxu0 %v754
    %1023 = vmatprep.subr.bf16.mxu0 %v753
    %1024 = vmatpush1.bf16.msra.mxu0 %v752
    %1025 = vmatprep.subr.bf16.mxu0 %v751
    %1026 = vmatpush1.bf16.msra.mxu0 %v750
    %1027 = vmatprep.subr.bf16.mxu0 %v749
    %1028 = vmatpush1.bf16.msra.mxu0 %v748
    %1029 = vmatprep.subr.bf16.mxu0 %v779
    %1030 = vmatpush2.bf16.msra.mxu0 %v778
    %1031 = vmatprep.subr.bf16.mxu0 %v777
    %1032 = vmatpush2.bf16.msra.mxu0 %v776
    %1033 = vmatprep.subr.bf16.mxu0 %v775
    %1034 = vmatpush2.bf16.msra.mxu0 %v774
    %1035 = vmatprep.subr.bf16.mxu0 %v773
    %1036 = vmatpush2.bf16.msra.mxu0 %v772
    %1037 = vmatprep.subr.bf16.mxu0 %v771
    %1038 = vmatpush2.bf16.msra.mxu0 %v770
    %1039 = vmatprep.subr.bf16.mxu0 %v769
    %1040 = vmatpush2.bf16.msra.mxu0 %v768
    %1041 = vmatprep.subr.bf16.mxu0 %v767
    %1042 = vmatpush2.bf16.msra.mxu0 %v766
    %1043 = vmatprep.subr.bf16.mxu0 %v765
    %1044 = vmatpush2.bf16.msra.mxu0 %v764
    %1045 = vmatprep.mubr.bf16.mxu0 %v90
    %1046 = vmatmul.mubr.bf16.gmra.mxu0 %v89
    %v1047 = vpop.f32.mrf.mxu0
    %v1048 = vadd.f32 %v1007, %v1047
    %v1049 = vpop.f32.mrf.mxu0
    %v1050 = vadd.f32 %v1009, %v1049
    %v1051 = vpop.f32.mrf.mxu0
    %v1052 = vpop.f32.mrf.mxu0
    %1053 = vdwg.mxu0
    %1054 = vmatprep.subr.bf16.mxu0 %v795
    %1055 = vmatpush1.bf16.msra.mxu0 %v794
    %1056 = vmatprep.subr.bf16.mxu0 %v793
    %1057 = vmatpush1.bf16.msra.mxu0 %v792
    %1058 = vmatprep.subr.bf16.mxu0 %v791
    %1059 = vmatpush1.bf16.msra.mxu0 %v790
    %1060 = vmatprep.subr.bf16.mxu0 %v789
    %1061 = vmatpush1.bf16.msra.mxu0 %v788
    %1062 = vmatprep.subr.bf16.mxu0 %v787
    %1063 = vmatpush1.bf16.msra.mxu0 %v786
    %1064 = vmatprep.subr.bf16.mxu0 %v785
    %1065 = vmatpush1.bf16.msra.mxu0 %v784
    %1066 = vmatprep.subr.bf16.mxu0 %v783
    %1067 = vmatpush1.bf16.msra.mxu0 %v782
    %1068 = vmatprep.subr.bf16.mxu0 %v781
    %1069 = vmatpush1.bf16.msra.mxu0 %v780
    %1070 = vmatprep.subr.bf16.mxu0 %v811
    %1071 = vmatpush2.bf16.msra.mxu0 %v810
    %1072 = vmatprep.subr.bf16.mxu0 %v809
    %1073 = vmatpush2.bf16.msra.mxu0 %v808
    %1074 = vmatprep.subr.bf16.mxu0 %v807
    %1075 = vmatpush2.bf16.msra.mxu0 %v806
    %1076 = vmatprep.subr.bf16.mxu0 %v805
    %1077 = vmatpush2.bf16.msra.mxu0 %v804
    %1078 = vmatprep.subr.bf16.mxu0 %v803
    %1079 = vmatpush2.bf16.msra.mxu0 %v802
    %1080 = vmatprep.subr.bf16.mxu0 %v801
    %1081 = vmatpush2.bf16.msra.mxu0 %v800
    %1082 = vmatprep.subr.bf16.mxu0 %v799
    %1083 = vmatpush2.bf16.msra.mxu0 %v798
    %1084 = vmatprep.subr.bf16.mxu0 %v797
    %1085 = vmatpush2.bf16.msra.mxu0 %v796
    %1086 = vmatprep.mubr.bf16.mxu0 %v92
    %1087 = vmatmul.mubr.bf16.gmra.mxu0 %v91
    %v1088 = vpop.f32.mrf.mxu0
    %v1089 = vadd.f32 %v1048, %v1088
    %v1090 = vpop.f32.mrf.mxu0
    %v1091 = vadd.f32 %v1050, %v1090
    %v1092 = vpop.f32.mrf.mxu0
    %v1093 = vpop.f32.mrf.mxu0
    %1094 = vdwg.mxu0
    %1095 = vmatprep.subr.bf16.mxu0 %v827
    %1096 = vmatpush1.bf16.msra.mxu0 %v826
    %1097 = vmatprep.subr.bf16.mxu0 %v825
    %1098 = vmatpush1.bf16.msra.mxu0 %v824
    %1099 = vmatprep.subr.bf16.mxu0 %v823
    %1100 = vmatpush1.bf16.msra.mxu0 %v822
    %1101 = vmatprep.subr.bf16.mxu0 %v821
    %1102 = vmatpush1.bf16.msra.mxu0 %v820
    %1103 = vmatprep.subr.bf16.mxu0 %v819
    %1104 = vmatpush1.bf16.msra.mxu0 %v818
    %1105 = vmatprep.subr.bf16.mxu0 %v817
    %1106 = vmatpush1.bf16.msra.mxu0 %v816
    %1107 = vmatprep.subr.bf16.mxu0 %v815
    %1108 = vmatpush1.bf16.msra.mxu0 %v814
    %1109 = vmatprep.subr.bf16.mxu0 %v813
    %1110 = vmatpush1.bf16.msra.mxu0 %v812
    %1111 = vmatprep.subr.bf16.mxu0 %v843
    %1112 = vmatpush2.bf16.msra.mxu0 %v842
    %1113 = vmatprep.subr.bf16.mxu0 %v841
    %1114 = vmatpush2.bf16.msra.mxu0 %v840
    %1115 = vmatprep.subr.bf16.mxu0 %v839
    %1116 = vmatpush2.bf16.msra.mxu0 %v838
    %1117 = vmatprep.subr.bf16.mxu0 %v837
    %1118 = vmatpush2.bf16.msra.mxu0 %v836
    %1119 = vmatprep.subr.bf16.mxu0 %v835
    %1120 = vmatpush2.bf16.msra.mxu0 %v834
    %1121 = vmatprep.subr.bf16.mxu0 %v833
    %1122 = vmatpush2.bf16.msra.mxu0 %v832
    %1123 = vmatprep.subr.bf16.mxu0 %v831
    %1124 = vmatpush2.bf16.msra.mxu0 %v830
    %1125 = vmatprep.subr.bf16.mxu0 %v829
    %1126 = vmatpush2.bf16.msra.mxu0 %v828
    %1127 = vmatprep.mubr.bf16.mxu0 %v94
    %1128 = vmatmul.mubr.bf16.gmra.mxu0 %v93
    %v1129 = vpop.f32.mrf.mxu0
    %v1130 = vadd.f32 %v1089, %v1129
    %v1131 = vpop.f32.mrf.mxu0
    %v1132 = vadd.f32 %v1091, %v1131
    %v1133 = vpop.f32.mrf.mxu0
    %v1134 = vpop.f32.mrf.mxu0
    %1135 = vdwg.mxu0
    %v1136 = vmax.f32 %v1130, 0.0
    %v1137 = vmax.f32 %v1132, 0.0
    %v1138 = vpack.c.bf16 %v1136, %v1136
    %v1139 = vpack.c.bf16 %v1137, %v1137
    %v1140 = vld [vmem:[#allocation11] sm:$0xff]
    %v1141 = vld [vmem:[#allocation11 + $0x8] sm:$0xff]
    %v1142 = vld [vmem:[#allocation11 + $0x10] sm:$0xff]
    %v1143 = vld [vmem:[#allocation11 + $0x18] sm:$0xff]
    %v1144 = vld [vmem:[#allocation11 + $0x20] sm:$0xff]
    %v1145 = vld [vmem:[#allocation11 + $0x28] sm:$0xff]
    %v1146 = vld [vmem:[#allocation11 + $0x30] sm:$0xff]
    %v1147 = vld [vmem:[#allocation11 + $0x38] sm:$0xff]
    %v1148 = vld [vmem:[#allocation11 + $0x40] sm:$0xff]
    %v1149 = vld [vmem:[#allocation11 + $0x48] sm:$0xff]
    %v1150 = vld [vmem:[#allocation11 + $0x50] sm:$0xff]
    %v1151 = vld [vmem:[#allocation11 + $0x58] sm:$0xff]
    %v1152 = vld [vmem:[#allocation11 + $0x60] sm:$0xff]
    %v1153 = vld [vmem:[#allocation11 + $0x68] sm:$0xff]
    %v1154 = vld [vmem:[#allocation11 + $0x70] sm:$0xff]
    %v1155 = vld [vmem:[#allocation11 + $0x78] sm:$0xff]
    %v1156 = vld [vmem:[#allocation11 + $0x80] sm:$0xff]
    %v1157 = vld [vmem:[#allocation11 + $0x88] sm:$0xff]
    %v1158 = vld [vmem:[#allocation11 + $0x90] sm:$0xff]
    %v1159 = vld [vmem:[#allocation11 + $0x98] sm:$0xff]
    %v1160 = vld [vmem:[#allocation11 + $0xa0] sm:$0xff]
    %v1161 = vld [vmem:[#allocation11 + $0xa8] sm:$0xff]
    %v1162 = vld [vmem:[#allocation11 + $0xb0] sm:$0xff]
    %v1163 = vld [vmem:[#allocation11 + $0xb8] sm:$0xff]
    %v1164 = vld [vmem:[#allocation11 + $0xc0] sm:$0xff]
    %v1165 = vld [vmem:[#allocation11 + $0xc8] sm:$0xff]
    %v1166 = vld [vmem:[#allocation11 + $0xd0] sm:$0xff]
    %v1167 = vld [vmem:[#allocation11 + $0xd8] sm:$0xff]
    %v1168 = vld [vmem:[#allocation11 + $0xe0] sm:$0xff]
    %v1169 = vld [vmem:[#allocation11 + $0xe8] sm:$0xff]
    %v1170 = vld [vmem:[#allocation11 + $0xf0] sm:$0xff]
    %v1171 = vld [vmem:[#allocation11 + $0xf8] sm:$0xff]
    %v1172 = vld [vmem:[#allocation11 + $0x100] sm:$0xff]
    %v1173 = vld [vmem:[#allocation11 + $0x108] sm:$0xff]
    %v1174 = vld [vmem:[#allocation11 + $0x110] sm:$0xff]
    %v1175 = vld [vmem:[#allocation11 + $0x118] sm:$0xff]
    %v1176 = vld [vmem:[#allocation11 + $0x120] sm:$0xff]
    %v1177 = vld [vmem:[#allocation11 + $0x128] sm:$0xff]
    %v1178 = vld [vmem:[#allocation11 + $0x130] sm:$0xff]
    %v1179 = vld [vmem:[#allocation11 + $0x138] sm:$0xff]
    %v1180 = vld [vmem:[#allocation11 + $0x140] sm:$0xff]
    %v1181 = vld [vmem:[#allocation11 + $0x148] sm:$0xff]
    %v1182 = vld [vmem:[#allocation11 + $0x150] sm:$0xff]
    %v1183 = vld [vmem:[#allocation11 + $0x158] sm:$0xff]
    %v1184 = vld [vmem:[#allocation11 + $0x160] sm:$0xff]
    %v1185 = vld [vmem:[#allocation11 + $0x168] sm:$0xff]
    %v1186 = vld [vmem:[#allocation11 + $0x170] sm:$0xff]
    %v1187 = vld [vmem:[#allocation11 + $0x178] sm:$0xff]
    %v1188 = vld [vmem:[#allocation11 + $0x180] sm:$0xff]
    %v1189 = vld [vmem:[#allocation11 + $0x188] sm:$0xff]
    %v1190 = vld [vmem:[#allocation11 + $0x190] sm:$0xff]
    %v1191 = vld [vmem:[#allocation11 + $0x198] sm:$0xff]
    %v1192 = vld [vmem:[#allocation11 + $0x1a0] sm:$0xff]
    %v1193 = vld [vmem:[#allocation11 + $0x1a8] sm:$0xff]
    %v1194 = vld [vmem:[#allocation11 + $0x1b0] sm:$0xff]
    %v1195 = vld [vmem:[#allocation11 + $0x1b8] sm:$0xff]
    %v1196 = vld [vmem:[#allocation11 + $0x1c0] sm:$0xff]
    %v1197 = vld [vmem:[#allocation11 + $0x1c8] sm:$0xff]
    %v1198 = vld [vmem:[#allocation11 + $0x1d0] sm:$0xff]
    %v1199 = vld [vmem:[#allocation11 + $0x1d8] sm:$0xff]
    %v1200 = vld [vmem:[#allocation11 + $0x1e0] sm:$0xff]
    %v1201 = vld [vmem:[#allocation11 + $0x1e8] sm:$0xff]
    %v1202 = vld [vmem:[#allocation11 + $0x1f0] sm:$0xff]
    %v1203 = vld [vmem:[#allocation11 + $0x1f8] sm:$0xff]
    %v1204 = vld [vmem:[#allocation11 + $0x200] sm:$0xff]
    %v1205 = vld [vmem:[#allocation11 + $0x208] sm:$0xff]
    %v1206 = vld [vmem:[#allocation11 + $0x210] sm:$0xff]
    %v1207 = vld [vmem:[#allocation11 + $0x218] sm:$0xff]
    %v1208 = vld [vmem:[#allocation11 + $0x220] sm:$0xff]
    %v1209 = vld [vmem:[#allocation11 + $0x228] sm:$0xff]
    %v1210 = vld [vmem:[#allocation11 + $0x230] sm:$0xff]
    %v1211 = vld [vmem:[#allocation11 + $0x238] sm:$0xff]
    %v1212 = vld [vmem:[#allocation11 + $0x240] sm:$0xff]
    %v1213 = vld [vmem:[#allocation11 + $0x248] sm:$0xff]
    %v1214 = vld [vmem:[#allocation11 + $0x250] sm:$0xff]
    %v1215 = vld [vmem:[#allocation11 + $0x258] sm:$0xff]
    %v1216 = vld [vmem:[#allocation11 + $0x260] sm:$0xff]
    %v1217 = vld [vmem:[#allocation11 + $0x268] sm:$0xff]
    %v1218 = vld [vmem:[#allocation11 + $0x270] sm:$0xff]
    %v1219 = vld [vmem:[#allocation11 + $0x278] sm:$0xff]
    %v1220 = vld [vmem:[#allocation11 + $0x280] sm:$0xff]
    %v1221 = vld [vmem:[#allocation11 + $0x288] sm:$0xff]
    %v1222 = vld [vmem:[#allocation11 + $0x290] sm:$0xff]
    %v1223 = vld [vmem:[#allocation11 + $0x298] sm:$0xff]
    %v1224 = vld [vmem:[#allocation11 + $0x2a0] sm:$0xff]
    %v1225 = vld [vmem:[#allocation11 + $0x2a8] sm:$0xff]
    %v1226 = vld [vmem:[#allocation11 + $0x2b0] sm:$0xff]
    %v1227 = vld [vmem:[#allocation11 + $0x2b8] sm:$0xff]
    %v1228 = vld [vmem:[#allocation11 + $0x2c0] sm:$0xff]
    %v1229 = vld [vmem:[#allocation11 + $0x2c8] sm:$0xff]
    %v1230 = vld [vmem:[#allocation11 + $0x2d0] sm:$0xff]
    %v1231 = vld [vmem:[#allocation11 + $0x2d8] sm:$0xff]
    %v1232 = vld [vmem:[#allocation11 + $0x2e0] sm:$0xff]
    %v1233 = vld [vmem:[#allocation11 + $0x2e8] sm:$0xff]
    %v1234 = vld [vmem:[#allocation11 + $0x2f0] sm:$0xff]
    %v1235 = vld [vmem:[#allocation11 + $0x2f8] sm:$0xff]
    %v1236 = vld [vmem:[#allocation11 + $0x300] sm:$0xff]
    %v1237 = vld [vmem:[#allocation11 + $0x308] sm:$0xff]
    %v1238 = vld [vmem:[#allocation11 + $0x310] sm:$0xff]
    %v1239 = vld [vmem:[#allocation11 + $0x318] sm:$0xff]
    %v1240 = vld [vmem:[#allocation11 + $0x320] sm:$0xff]
    %v1241 = vld [vmem:[#allocation11 + $0x328] sm:$0xff]
    %v1242 = vld [vmem:[#allocation11 + $0x330] sm:$0xff]
    %v1243 = vld [vmem:[#allocation11 + $0x338] sm:$0xff]
    %v1244 = vld [vmem:[#allocation11 + $0x340] sm:$0xff]
    %v1245 = vld [vmem:[#allocation11 + $0x348] sm:$0xff]
    %v1246 = vld [vmem:[#allocation11 + $0x350] sm:$0xff]
    %v1247 = vld [vmem:[#allocation11 + $0x358] sm:$0xff]
    %v1248 = vld [vmem:[#allocation11 + $0x360] sm:$0xff]
    %v1249 = vld [vmem:[#allocation11 + $0x368] sm:$0xff]
    %v1250 = vld [vmem:[#allocation11 + $0x370] sm:$0xff]
    %v1251 = vld [vmem:[#allocation11 + $0x378] sm:$0xff]
    %v1252 = vld [vmem:[#allocation11 + $0x380] sm:$0xff]
    %v1253 = vld [vmem:[#allocation11 + $0x388] sm:$0xff]
    %v1254 = vld [vmem:[#allocation11 + $0x390] sm:$0xff]
    %v1255 = vld [vmem:[#allocation11 + $0x398] sm:$0xff]
    %v1256 = vld [vmem:[#allocation11 + $0x3a0] sm:$0xff]
    %v1257 = vld [vmem:[#allocation11 + $0x3a8] sm:$0xff]
    %v1258 = vld [vmem:[#allocation11 + $0x3b0] sm:$0xff]
    %v1259 = vld [vmem:[#allocation11 + $0x3b8] sm:$0xff]
    %v1260 = vld [vmem:[#allocation11 + $0x3c0] sm:$0xff]
    %v1261 = vld [vmem:[#allocation11 + $0x3c8] sm:$0xff]
    %v1262 = vld [vmem:[#allocation11 + $0x3d0] sm:$0xff]
    %v1263 = vld [vmem:[#allocation11 + $0x3d8] sm:$0xff]
    %v1264 = vld [vmem:[#allocation11 + $0x3e0] sm:$0xff]
    %v1265 = vld [vmem:[#allocation11 + $0x3e8] sm:$0xff]
    %v1266 = vld [vmem:[#allocation11 + $0x3f0] sm:$0xff]
    %v1267 = vld [vmem:[#allocation11 + $0x3f8] sm:$0xff]
    %v1268 = vld [vmem:[%s5] sm:$0xff]
    %v1270 = vlaneseq
    %v1271 = vshrl.u32 %v1270, 7
    %v1272 = vsub.s32 0, %v1271
    %v1273 = vrot.slane %v1268, %v1272
    %v1274 = vlaneseq
    %v1275 = vshrl.u32 %v1274, 7
    %v1276 = vsub.s32 1, %v1275
    %v1277 = vrot.slane %v1268, %v1276
    %v1278 = vlaneseq
    %v1279 = vshrl.u32 %v1278, 7
    %v1280 = vsub.s32 2, %v1279
    %v1281 = vrot.slane %v1268, %v1280
    %v1282 = vlaneseq
    %v1283 = vshrl.u32 %v1282, 7
    %v1284 = vsub.s32 3, %v1283
    %v1285 = vrot.slane %v1268, %v1284
    %v1286 = vlaneseq
    %v1287 = vshrl.u32 %v1286, 7
    %v1288 = vsub.s32 4, %v1287
    %v1289 = vrot.slane %v1268, %v1288
    %v1290 = vlaneseq
    %v1291 = vshrl.u32 %v1290, 7
    %v1292 = vsub.s32 5, %v1291
    %v1293 = vrot.slane %v1268, %v1292
    %v1294 = vlaneseq
    %v1295 = vshrl.u32 %v1294, 7
    %v1296 = vsub.s32 6, %v1295
    %v1297 = vrot.slane %v1268, %v1296
    %v1298 = vlaneseq
    %v1299 = vshrl.u32 %v1298, 7
    %v1300 = vsub.s32 7, %v1299
    %v1301 = vrot.slane %v1268, %v1300
    %v1438 = vunpack.c.l.b16 %v1140
    %v1439 = vunpack.c.h.b16 %v1140
    %v1440 = vunpack.c.l.b16 %v1141
    %v1441 = vunpack.c.h.b16 %v1141
    %v1442 = vunpack.c.l.b16 %v1142
    %v1443 = vunpack.c.h.b16 %v1142
    %v1444 = vunpack.c.l.b16 %v1143
    %v1445 = vunpack.c.h.b16 %v1143
    %v1446 = vunpack.c.l.b16 %v1144
    %v1447 = vunpack.c.h.b16 %v1144
    %v1448 = vunpack.c.l.b16 %v1145
    %v1449 = vunpack.c.h.b16 %v1145
    %v1450 = vunpack.c.l.b16 %v1146
    %v1451 = vunpack.c.h.b16 %v1146
    %v1452 = vunpack.c.l.b16 %v1147
    %v1453 = vunpack.c.h.b16 %v1147
    %v1454 = vunpack.c.l.b16 %v1148
    %v1455 = vunpack.c.h.b16 %v1148
    %v1456 = vunpack.c.l.b16 %v1149
    %v1457 = vunpack.c.h.b16 %v1149
    %v1458 = vunpack.c.l.b16 %v1150
    %v1459 = vunpack.c.h.b16 %v1150
    %v1460 = vunpack.c.l.b16 %v1151
    %v1461 = vunpack.c.h.b16 %v1151
    %v1462 = vunpack.c.l.b16 %v1152
    %v1463 = vunpack.c.h.b16 %v1152
    %v1464 = vunpack.c.l.b16 %v1153
    %v1465 = vunpack.c.h.b16 %v1153
    %v1466 = vunpack.c.l.b16 %v1154
    %v1467 = vunpack.c.h.b16 %v1154
    %v1468 = vunpack.c.l.b16 %v1155
    %v1469 = vunpack.c.h.b16 %v1155
    %v1470 = vunpack.c.l.b16 %v1156
    %v1471 = vunpack.c.h.b16 %v1156
    %v1472 = vunpack.c.l.b16 %v1157
    %v1473 = vunpack.c.h.b16 %v1157
    %v1474 = vunpack.c.l.b16 %v1158
    %v1475 = vunpack.c.h.b16 %v1158
    %v1476 = vunpack.c.l.b16 %v1159
    %v1477 = vunpack.c.h.b16 %v1159
    %v1478 = vunpack.c.l.b16 %v1160
    %v1479 = vunpack.c.h.b16 %v1160
    %v1480 = vunpack.c.l.b16 %v1161
    %v1481 = vunpack.c.h.b16 %v1161
    %v1482 = vunpack.c.l.b16 %v1162
    %v1483 = vunpack.c.h.b16 %v1162
    %v1484 = vunpack.c.l.b16 %v1163
    %v1485 = vunpack.c.h.b16 %v1163
    %v1486 = vunpack.c.l.b16 %v1164
    %v1487 = vunpack.c.h.b16 %v1164
    %v1488 = vunpack.c.l.b16 %v1165
    %v1489 = vunpack.c.h.b16 %v1165
    %v1490 = vunpack.c.l.b16 %v1166
    %v1491 = vunpack.c.h.b16 %v1166
    %v1492 = vunpack.c.l.b16 %v1167
    %v1493 = vunpack.c.h.b16 %v1167
    %v1494 = vunpack.c.l.b16 %v1168
    %v1495 = vunpack.c.h.b16 %v1168
    %v1496 = vunpack.c.l.b16 %v1169
    %v1497 = vunpack.c.h.b16 %v1169
    %v1498 = vunpack.c.l.b16 %v1170
    %v1499 = vunpack.c.h.b16 %v1170
    %v1500 = vunpack.c.l.b16 %v1171
    %v1501 = vunpack.c.h.b16 %v1171
    %v1502 = vunpack.c.l.b16 %v1172
    %v1503 = vunpack.c.h.b16 %v1172
    %v1504 = vunpack.c.l.b16 %v1173
    %v1505 = vunpack.c.h.b16 %v1173
    %v1506 = vunpack.c.l.b16 %v1174
    %v1507 = vunpack.c.h.b16 %v1174
    %v1508 = vunpack.c.l.b16 %v1175
    %v1509 = vunpack.c.h.b16 %v1175
    %v1510 = vunpack.c.l.b16 %v1176
    %v1511 = vunpack.c.h.b16 %v1176
    %v1512 = vunpack.c.l.b16 %v1177
    %v1513 = vunpack.c.h.b16 %v1177
    %v1514 = vunpack.c.l.b16 %v1178
    %v1515 = vunpack.c.h.b16 %v1178
    %v1516 = vunpack.c.l.b16 %v1179
    %v1517 = vunpack.c.h.b16 %v1179
    %v1518 = vunpack.c.l.b16 %v1180
    %v1519 = vunpack.c.h.b16 %v1180
    %v1520 = vunpack.c.l.b16 %v1181
    %v1521 = vunpack.c.h.b16 %v1181
    %v1522 = vunpack.c.l.b16 %v1182
    %v1523 = vunpack.c.h.b16 %v1182
    %v1524 = vunpack.c.l.b16 %v1183
    %v1525 = vunpack.c.h.b16 %v1183
    %v1526 = vunpack.c.l.b16 %v1184
    %v1527 = vunpack.c.h.b16 %v1184
    %v1528 = vunpack.c.l.b16 %v1185
    %v1529 = vunpack.c.h.b16 %v1185
    %v1530 = vunpack.c.l.b16 %v1186
    %v1531 = vunpack.c.h.b16 %v1186
    %v1532 = vunpack.c.l.b16 %v1187
    %v1533 = vunpack.c.h.b16 %v1187
    %v1534 = vunpack.c.l.b16 %v1188
    %v1535 = vunpack.c.h.b16 %v1188
    %v1536 = vunpack.c.l.b16 %v1189
    %v1537 = vunpack.c.h.b16 %v1189
    %v1538 = vunpack.c.l.b16 %v1190
    %v1539 = vunpack.c.h.b16 %v1190
    %v1540 = vunpack.c.l.b16 %v1191
    %v1541 = vunpack.c.h.b16 %v1191
    %v1542 = vunpack.c.l.b16 %v1192
    %v1543 = vunpack.c.h.b16 %v1192
    %v1544 = vunpack.c.l.b16 %v1193
    %v1545 = vunpack.c.h.b16 %v1193
    %v1546 = vunpack.c.l.b16 %v1194
    %v1547 = vunpack.c.h.b16 %v1194
    %v1548 = vunpack.c.l.b16 %v1195
    %v1549 = vunpack.c.h.b16 %v1195
    %v1550 = vunpack.c.l.b16 %v1196
    %v1551 = vunpack.c.h.b16 %v1196
    %v1552 = vunpack.c.l.b16 %v1197
    %v1553 = vunpack.c.h.b16 %v1197
    %v1554 = vunpack.c.l.b16 %v1198
    %v1555 = vunpack.c.h.b16 %v1198
    %v1556 = vunpack.c.l.b16 %v1199
    %v1557 = vunpack.c.h.b16 %v1199
    %v1558 = vunpack.c.l.b16 %v1200
    %v1559 = vunpack.c.h.b16 %v1200
    %v1560 = vunpack.c.l.b16 %v1201
    %v1561 = vunpack.c.h.b16 %v1201
    %v1562 = vunpack.c.l.b16 %v1202
    %v1563 = vunpack.c.h.b16 %v1202
    %v1564 = vunpack.c.l.b16 %v1203
    %v1565 = vunpack.c.h.b16 %v1203
    %v1566 = vunpack.c.l.b16 %v1204
    %v1567 = vunpack.c.h.b16 %v1204
    %v1568 = vunpack.c.l.b16 %v1205
    %v1569 = vunpack.c.h.b16 %v1205
    %v1570 = vunpack.c.l.b16 %v1206
    %v1571 = vunpack.c.h.b16 %v1206
    %v1572 = vunpack.c.l.b16 %v1207
    %v1573 = vunpack.c.h.b16 %v1207
    %v1574 = vunpack.c.l.b16 %v1208
    %v1575 = vunpack.c.h.b16 %v1208
    %v1576 = vunpack.c.l.b16 %v1209
    %v1577 = vunpack.c.h.b16 %v1209
    %v1578 = vunpack.c.l.b16 %v1210
    %v1579 = vunpack.c.h.b16 %v1210
    %v1580 = vunpack.c.l.b16 %v1211
    %v1581 = vunpack.c.h.b16 %v1211
    %v1582 = vunpack.c.l.b16 %v1212
    %v1583 = vunpack.c.h.b16 %v1212
    %v1584 = vunpack.c.l.b16 %v1213
    %v1585 = vunpack.c.h.b16 %v1213
    %v1586 = vunpack.c.l.b16 %v1214
    %v1587 = vunpack.c.h.b16 %v1214
    %v1588 = vunpack.c.l.b16 %v1215
    %v1589 = vunpack.c.h.b16 %v1215
    %v1590 = vunpack.c.l.b16 %v1216
    %v1591 = vunpack.c.h.b16 %v1216
    %v1592 = vunpack.c.l.b16 %v1217
    %v1593 = vunpack.c.h.b16 %v1217
    %v1594 = vunpack.c.l.b16 %v1218
    %v1595 = vunpack.c.h.b16 %v1218
    %v1596 = vunpack.c.l.b16 %v1219
    %v1597 = vunpack.c.h.b16 %v1219
    %v1598 = vunpack.c.l.b16 %v1220
    %v1599 = vunpack.c.h.b16 %v1220
    %v1600 = vunpack.c.l.b16 %v1221
    %v1601 = vunpack.c.h.b16 %v1221
    %v1602 = vunpack.c.l.b16 %v1222
    %v1603 = vunpack.c.h.b16 %v1222
    %v1604 = vunpack.c.l.b16 %v1223
    %v1605 = vunpack.c.h.b16 %v1223
    %v1606 = vunpack.c.l.b16 %v1224
    %v1607 = vunpack.c.h.b16 %v1224
    %v1608 = vunpack.c.l.b16 %v1225
    %v1609 = vunpack.c.h.b16 %v1225
    %v1610 = vunpack.c.l.b16 %v1226
    %v1611 = vunpack.c.h.b16 %v1226
    %v1612 = vunpack.c.l.b16 %v1227
    %v1613 = vunpack.c.h.b16 %v1227
    %v1614 = vunpack.c.l.b16 %v1228
    %v1615 = vunpack.c.h.b16 %v1228
    %v1616 = vunpack.c.l.b16 %v1229
    %v1617 = vunpack.c.h.b16 %v1229
    %v1618 = vunpack.c.l.b16 %v1230
    %v1619 = vunpack.c.h.b16 %v1230
    %v1620 = vunpack.c.l.b16 %v1231
    %v1621 = vunpack.c.h.b16 %v1231
    %v1622 = vunpack.c.l.b16 %v1232
    %v1623 = vunpack.c.h.b16 %v1232
    %v1624 = vunpack.c.l.b16 %v1233
    %v1625 = vunpack.c.h.b16 %v1233
    %v1626 = vunpack.c.l.b16 %v1234
    %v1627 = vunpack.c.h.b16 %v1234
    %v1628 = vunpack.c.l.b16 %v1235
    %v1629 = vunpack.c.h.b16 %v1235
    %v1630 = vunpack.c.l.b16 %v1236
    %v1631 = vunpack.c.h.b16 %v1236
    %v1632 = vunpack.c.l.b16 %v1237
    %v1633 = vunpack.c.h.b16 %v1237
    %v1634 = vunpack.c.l.b16 %v1238
    %v1635 = vunpack.c.h.b16 %v1238
    %v1636 = vunpack.c.l.b16 %v1239
    %v1637 = vunpack.c.h.b16 %v1239
    %v1638 = vunpack.c.l.b16 %v1240
    %v1639 = vunpack.c.h.b16 %v1240
    %v1640 = vunpack.c.l.b16 %v1241
    %v1641 = vunpack.c.h.b16 %v1241
    %v1642 = vunpack.c.l.b16 %v1242
    %v1643 = vunpack.c.h.b16 %v1242
    %v1644 = vunpack.c.l.b16 %v1243
    %v1645 = vunpack.c.h.b16 %v1243
    %v1646 = vunpack.c.l.b16 %v1244
    %v1647 = vunpack.c.h.b16 %v1244
    %v1648 = vunpack.c.l.b16 %v1245
    %v1649 = vunpack.c.h.b16 %v1245
    %v1650 = vunpack.c.l.b16 %v1246
    %v1651 = vunpack.c.h.b16 %v1246
    %v1652 = vunpack.c.l.b16 %v1247
    %v1653 = vunpack.c.h.b16 %v1247
    %v1654 = vunpack.c.l.b16 %v1248
    %v1655 = vunpack.c.h.b16 %v1248
    %v1656 = vunpack.c.l.b16 %v1249
    %v1657 = vunpack.c.h.b16 %v1249
    %v1658 = vunpack.c.l.b16 %v1250
    %v1659 = vunpack.c.h.b16 %v1250
    %v1660 = vunpack.c.l.b16 %v1251
    %v1661 = vunpack.c.h.b16 %v1251
    %v1662 = vunpack.c.l.b16 %v1252
    %v1663 = vunpack.c.h.b16 %v1252
    %v1664 = vunpack.c.l.b16 %v1253
    %v1665 = vunpack.c.h.b16 %v1253
    %v1666 = vunpack.c.l.b16 %v1254
    %v1667 = vunpack.c.h.b16 %v1254
    %v1668 = vunpack.c.l.b16 %v1255
    %v1669 = vunpack.c.h.b16 %v1255
    %v1670 = vunpack.c.l.b16 %v1256
    %v1671 = vunpack.c.h.b16 %v1256
    %v1672 = vunpack.c.l.b16 %v1257
    %v1673 = vunpack.c.h.b16 %v1257
    %v1674 = vunpack.c.l.b16 %v1258
    %v1675 = vunpack.c.h.b16 %v1258
    %v1676 = vunpack.c.l.b16 %v1259
    %v1677 = vunpack.c.h.b16 %v1259
    %v1678 = vunpack.c.l.b16 %v1260
    %v1679 = vunpack.c.h.b16 %v1260
    %v1680 = vunpack.c.l.b16 %v1261
    %v1681 = vunpack.c.h.b16 %v1261
    %v1682 = vunpack.c.l.b16 %v1262
    %v1683 = vunpack.c.h.b16 %v1262
    %v1684 = vunpack.c.l.b16 %v1263
    %v1685 = vunpack.c.h.b16 %v1263
    %v1686 = vunpack.c.l.b16 %v1264
    %v1687 = vunpack.c.h.b16 %v1264
    %v1688 = vunpack.c.l.b16 %v1265
    %v1689 = vunpack.c.h.b16 %v1265
    %v1690 = vunpack.c.l.b16 %v1266
    %v1691 = vunpack.c.h.b16 %v1266
    %v1692 = vunpack.c.l.b16 %v1267
    %v1693 = vunpack.c.h.b16 %v1267
    %v1694 = vpack.c.b16 %v1446, %v1438
    %v1695 = vpack.c.b16 %v1447, %v1439
    %v1696 = vpack.c.b16 %v1448, %v1440
    %v1697 = vpack.c.b16 %v1449, %v1441
    %v1698 = vpack.c.b16 %v1450, %v1442
    %v1699 = vpack.c.b16 %v1451, %v1443
    %v1700 = vpack.c.b16 %v1452, %v1444
    %v1701 = vpack.c.b16 %v1453, %v1445
    %v1702 = vpack.c.b16 %v1462, %v1454
    %v1703 = vpack.c.b16 %v1463, %v1455
    %v1704 = vpack.c.b16 %v1464, %v1456
    %v1705 = vpack.c.b16 %v1465, %v1457
    %v1706 = vpack.c.b16 %v1466, %v1458
    %v1707 = vpack.c.b16 %v1467, %v1459
    %v1708 = vpack.c.b16 %v1468, %v1460
    %v1709 = vpack.c.b16 %v1469, %v1461
    %v1710 = vpack.c.b16 %v1478, %v1470
    %v1711 = vpack.c.b16 %v1479, %v1471
    %v1712 = vpack.c.b16 %v1480, %v1472
    %v1713 = vpack.c.b16 %v1481, %v1473
    %v1714 = vpack.c.b16 %v1482, %v1474
    %v1715 = vpack.c.b16 %v1483, %v1475
    %v1716 = vpack.c.b16 %v1484, %v1476
    %v1717 = vpack.c.b16 %v1485, %v1477
    %v1718 = vpack.c.b16 %v1494, %v1486
    %v1719 = vpack.c.b16 %v1495, %v1487
    %v1720 = vpack.c.b16 %v1496, %v1488
    %v1721 = vpack.c.b16 %v1497, %v1489
    %v1722 = vpack.c.b16 %v1498, %v1490
    %v1723 = vpack.c.b16 %v1499, %v1491
    %v1724 = vpack.c.b16 %v1500, %v1492
    %v1725 = vpack.c.b16 %v1501, %v1493
    %v1726 = vpack.c.b16 %v1510, %v1502
    %v1727 = vpack.c.b16 %v1511, %v1503
    %v1728 = vpack.c.b16 %v1512, %v1504
    %v1729 = vpack.c.b16 %v1513, %v1505
    %v1730 = vpack.c.b16 %v1514, %v1506
    %v1731 = vpack.c.b16 %v1515, %v1507
    %v1732 = vpack.c.b16 %v1516, %v1508
    %v1733 = vpack.c.b16 %v1517, %v1509
    %v1734 = vpack.c.b16 %v1526, %v1518
    %v1735 = vpack.c.b16 %v1527, %v1519
    %v1736 = vpack.c.b16 %v1528, %v1520
    %v1737 = vpack.c.b16 %v1529, %v1521
    %v1738 = vpack.c.b16 %v1530, %v1522
    %v1739 = vpack.c.b16 %v1531, %v1523
    %v1740 = vpack.c.b16 %v1532, %v1524
    %v1741 = vpack.c.b16 %v1533, %v1525
    %v1742 = vpack.c.b16 %v1542, %v1534
    %v1743 = vpack.c.b16 %v1543, %v1535
    %v1744 = vpack.c.b16 %v1544, %v1536
    %v1745 = vpack.c.b16 %v1545, %v1537
    %v1746 = vpack.c.b16 %v1546, %v1538
    %v1747 = vpack.c.b16 %v1547, %v1539
    %v1748 = vpack.c.b16 %v1548, %v1540
    %v1749 = vpack.c.b16 %v1549, %v1541
    %v1750 = vpack.c.b16 %v1558, %v1550
    %v1751 = vpack.c.b16 %v1559, %v1551
    %v1752 = vpack.c.b16 %v1560, %v1552
    %v1753 = vpack.c.b16 %v1561, %v1553
    %v1754 = vpack.c.b16 %v1562, %v1554
    %v1755 = vpack.c.b16 %v1563, %v1555
    %v1756 = vpack.c.b16 %v1564, %v1556
    %v1757 = vpack.c.b16 %v1565, %v1557
    %v1758 = vpack.c.b16 %v1574, %v1566
    %v1759 = vpack.c.b16 %v1575, %v1567
    %v1760 = vpack.c.b16 %v1576, %v1568
    %v1761 = vpack.c.b16 %v1577, %v1569
    %v1762 = vpack.c.b16 %v1578, %v1570
    %v1763 = vpack.c.b16 %v1579, %v1571
    %v1764 = vpack.c.b16 %v1580, %v1572
    %v1765 = vpack.c.b16 %v1581, %v1573
    %v1766 = vpack.c.b16 %v1590, %v1582
    %v1767 = vpack.c.b16 %v1591, %v1583
    %v1768 = vpack.c.b16 %v1592, %v1584
    %v1769 = vpack.c.b16 %v1593, %v1585
    %v1770 = vpack.c.b16 %v1594, %v1586
    %v1771 = vpack.c.b16 %v1595, %v1587
    %v1772 = vpack.c.b16 %v1596, %v1588
    %v1773 = vpack.c.b16 %v1597, %v1589
    %v1774 = vpack.c.b16 %v1606, %v1598
    %v1775 = vpack.c.b16 %v1607, %v1599
    %v1776 = vpack.c.b16 %v1608, %v1600
    %v1777 = vpack.c.b16 %v1609, %v1601
    %v1778 = vpack.c.b16 %v1610, %v1602
    %v1779 = vpack.c.b16 %v1611, %v1603
    %v1780 = vpack.c.b16 %v1612, %v1604
    %v1781 = vpack.c.b16 %v1613, %v1605
    %v1782 = vpack.c.b16 %v1622, %v1614
    %v1783 = vpack.c.b16 %v1623, %v1615
    %v1784 = vpack.c.b16 %v1624, %v1616
    %v1785 = vpack.c.b16 %v1625, %v1617
    %v1786 = vpack.c.b16 %v1626, %v1618
    %v1787 = vpack.c.b16 %v1627, %v1619
    %v1788 = vpack.c.b16 %v1628, %v1620
    %v1789 = vpack.c.b16 %v1629, %v1621
    %v1790 = vpack.c.b16 %v1638, %v1630
    %v1791 = vpack.c.b16 %v1639, %v1631
    %v1792 = vpack.c.b16 %v1640, %v1632
    %v1793 = vpack.c.b16 %v1641, %v1633
    %v1794 = vpack.c.b16 %v1642, %v1634
    %v1795 = vpack.c.b16 %v1643, %v1635
    %v1796 = vpack.c.b16 %v1644, %v1636
    %v1797 = vpack.c.b16 %v1645, %v1637
    %v1798 = vpack.c.b16 %v1654, %v1646
    %v1799 = vpack.c.b16 %v1655, %v1647
    %v1800 = vpack.c.b16 %v1656, %v1648
    %v1801 = vpack.c.b16 %v1657, %v1649
    %v1802 = vpack.c.b16 %v1658, %v1650
    %v1803 = vpack.c.b16 %v1659, %v1651
    %v1804 = vpack.c.b16 %v1660, %v1652
    %v1805 = vpack.c.b16 %v1661, %v1653
    %v1806 = vpack.c.b16 %v1670, %v1662
    %v1807 = vpack.c.b16 %v1671, %v1663
    %v1808 = vpack.c.b16 %v1672, %v1664
    %v1809 = vpack.c.b16 %v1673, %v1665
    %v1810 = vpack.c.b16 %v1674, %v1666
    %v1811 = vpack.c.b16 %v1675, %v1667
    %v1812 = vpack.c.b16 %v1676, %v1668
    %v1813 = vpack.c.b16 %v1677, %v1669
    %v1814 = vpack.c.b16 %v1686, %v1678
    %v1815 = vpack.c.b16 %v1687, %v1679
    %v1816 = vpack.c.b16 %v1688, %v1680
    %v1817 = vpack.c.b16 %v1689, %v1681
    %v1818 = vpack.c.b16 %v1690, %v1682
    %v1819 = vpack.c.b16 %v1691, %v1683
    %v1820 = vpack.c.b16 %v1692, %v1684
    %v1821 = vpack.c.b16 %v1693, %v1685
    %1950 = vmatprep.subr.bf16.mxu0 %v1751
    %1951 = vmatpush1.bf16.msra.mxu0 %v1750
    %1952 = vmatprep.subr.bf16.mxu0 %v1743
    %1953 = vmatpush1.bf16.msra.mxu0 %v1742
    %1954 = vmatprep.subr.bf16.mxu0 %v1735
    %1955 = vmatpush1.bf16.msra.mxu0 %v1734
    %1956 = vmatprep.subr.bf16.mxu0 %v1727
    %1957 = vmatpush1.bf16.msra.mxu0 %v1726
    %1958 = vmatprep.subr.bf16.mxu0 %v1719
    %1959 = vmatpush1.bf16.msra.mxu0 %v1718
    %1960 = vmatprep.subr.bf16.mxu0 %v1711
    %1961 = vmatpush1.bf16.msra.mxu0 %v1710
    %1962 = vmatprep.subr.bf16.mxu0 %v1703
    %1963 = vmatpush1.bf16.msra.mxu0 %v1702
    %1964 = vmatprep.subr.bf16.mxu0 %v1695
    %1965 = vmatpush1.bf16.msra.mxu0 %v1694
    %1966 = vmatprep.subr.bf16.mxu0 %v1815
    %1967 = vmatpush2.bf16.msra.mxu0 %v1814
    %1968 = vmatprep.subr.bf16.mxu0 %v1807
    %1969 = vmatpush2.bf16.msra.mxu0 %v1806
    %1970 = vmatprep.subr.bf16.mxu0 %v1799
    %1971 = vmatpush2.bf16.msra.mxu0 %v1798
    %1972 = vmatprep.subr.bf16.mxu0 %v1791
    %1973 = vmatpush2.bf16.msra.mxu0 %v1790
    %1974 = vmatprep.subr.bf16.mxu0 %v1783
    %1975 = vmatpush2.bf16.msra.mxu0 %v1782
    %1976 = vmatprep.subr.bf16.mxu0 %v1775
    %1977 = vmatpush2.bf16.msra.mxu0 %v1774
    %1978 = vmatprep.subr.bf16.mxu0 %v1767
    %1979 = vmatpush2.bf16.msra.mxu0 %v1766
    %1980 = vmatprep.subr.bf16.mxu0 %v1759
    %1981 = vmatpush2.bf16.msra.mxu0 %v1758
    %1982 = vmatprep.mubr.bf16.mxu0 %v1139
    %1983 = vmatmul.mubr.bf16.gmra.mxu0 %v1138
    %v1984 = vpop.f32.mrf.mxu0
    %v1985 = vadd.f32 %v1273, %v1984
    %v1986 = vpop.f32.mrf.mxu0
    %v1987 = vadd.f32 %v1277, %v1986
    %v1988 = vpop.f32.mrf.mxu0
    %v1989 = vpop.f32.mrf.mxu0
    %1990 = vdwg.mxu0
    %1991 = vmatprep.subr.bf16.mxu0 %v1753
    %1992 = vmatpush1.bf16.msra.mxu0 %v1752
    %1993 = vmatprep.subr.bf16.mxu0 %v1745
    %1994 = vmatpush1.bf16.msra.mxu0 %v1744
    %1995 = vmatprep.subr.bf16.mxu0 %v1737
    %1996 = vmatpush1.bf16.msra.mxu0 %v1736
    %1997 = vmatprep.subr.bf16.mxu0 %v1729
    %1998 = vmatpush1.bf16.msra.mxu0 %v1728
    %1999 = vmatprep.subr.bf16.mxu0 %v1721
    %2000 = vmatpush1.bf16.msra.mxu0 %v1720
    %2001 = vmatprep.subr.bf16.mxu0 %v1713
    %2002 = vmatpush1.bf16.msra.mxu0 %v1712
    %2003 = vmatprep.subr.bf16.mxu0 %v1705
    %2004 = vmatpush1.bf16.msra.mxu0 %v1704
    %2005 = vmatprep.subr.bf16.mxu0 %v1697
    %2006 = vmatpush1.bf16.msra.mxu0 %v1696
    %2007 = vmatprep.subr.bf16.mxu0 %v1817
    %2008 = vmatpush2.bf16.msra.mxu0 %v1816
    %2009 = vmatprep.subr.bf16.mxu0 %v1809
    %2010 = vmatpush2.bf16.msra.mxu0 %v1808
    %2011 = vmatprep.subr.bf16.mxu0 %v1801
    %2012 = vmatpush2.bf16.msra.mxu0 %v1800
    %2013 = vmatprep.subr.bf16.mxu0 %v1793
    %2014 = vmatpush2.bf16.msra.mxu0 %v1792
    %2015 = vmatprep.subr.bf16.mxu0 %v1785
    %2016 = vmatpush2.bf16.msra.mxu0 %v1784
    %2017 = vmatprep.subr.bf16.mxu0 %v1777
    %2018 = vmatpush2.bf16.msra.mxu0 %v1776
    %2019 = vmatprep.subr.bf16.mxu0 %v1769
    %2020 = vmatpush2.bf16.msra.mxu0 %v1768
    %2021 = vmatprep.subr.bf16.mxu0 %v1761
    %2022 = vmatpush2.bf16.msra.mxu0 %v1760
    %2023 = vmatprep.mubr.bf16.mxu0 %v1139
    %2024 = vmatmul.mubr.bf16.gmra.mxu0 %v1138
    %v2025 = vpop.f32.mrf.mxu0
    %v2026 = vadd.f32 %v1281, %v2025
    %v2027 = vpop.f32.mrf.mxu0
    %v2028 = vadd.f32 %v1285, %v2027
    %v2029 = vpop.f32.mrf.mxu0
    %v2030 = vpop.f32.mrf.mxu0
    %2031 = vdwg.mxu0
    %2032 = vmatprep.subr.bf16.mxu0 %v1755
    %2033 = vmatpush1.bf16.msra.mxu0 %v1754
    %2034 = vmatprep.subr.bf16.mxu0 %v1747
    %2035 = vmatpush1.bf16.msra.mxu0 %v1746
    %2036 = vmatprep.subr.bf16.mxu0 %v1739
    %2037 = vmatpush1.bf16.msra.mxu0 %v1738
    %2038 = vmatprep.subr.bf16.mxu0 %v1731
    %2039 = vmatpush1.bf16.msra.mxu0 %v1730
    %2040 = vmatprep.subr.bf16.mxu0 %v1723
    %2041 = vmatpush1.bf16.msra.mxu0 %v1722
    %2042 = vmatprep.subr.bf16.mxu0 %v1715
    %2043 = vmatpush1.bf16.msra.mxu0 %v1714
    %2044 = vmatprep.subr.bf16.mxu0 %v1707
    %2045 = vmatpush1.bf16.msra.mxu0 %v1706
    %2046 = vmatprep.subr.bf16.mxu0 %v1699
    %2047 = vmatpush1.bf16.msra.mxu0 %v1698
    %2048 = vmatprep.subr.bf16.mxu0 %v1819
    %2049 = vmatpush2.bf16.msra.mxu0 %v1818
    %2050 = vmatprep.subr.bf16.mxu0 %v1811
    %2051 = vmatpush2.bf16.msra.mxu0 %v1810
    %2052 = vmatprep.subr.bf16.mxu0 %v1803
    %2053 = vmatpush2.bf16.msra.mxu0 %v1802
    %2054 = vmatprep.subr.bf16.mxu0 %v1795
    %2055 = vmatpush2.bf16.msra.mxu0 %v1794
    %2056 = vmatprep.subr.bf16.mxu0 %v1787
    %2057 = vmatpush2.bf16.msra.mxu0 %v1786
    %2058 = vmatprep.subr.bf16.mxu0 %v1779
    %2059 = vmatpush2.bf16.msra.mxu0 %v1778
    %2060 = vmatprep.subr.bf16.mxu0 %v1771
    %2061 = vmatpush2.bf16.msra.mxu0 %v1770
    %2062 = vmatprep.subr.bf16.mxu0 %v1763
    %2063 = vmatpush2.bf16.msra.mxu0 %v1762
    %2064 = vmatprep.mubr.bf16.mxu0 %v1139
    %2065 = vmatmul.mubr.bf16.gmra.mxu0 %v1138
    %v2066 = vpop.f32.mrf.mxu0
    %v2067 = vadd.f32 %v1289, %v2066
    %v2068 = vpop.f32.mrf.mxu0
    %v2069 = vadd.f32 %v1293, %v2068
    %v2070 = vpop.f32.mrf.mxu0
    %v2071 = vpop.f32.mrf.mxu0
    %2072 = vdwg.mxu0
    %2073 = vmatprep.subr.bf16.mxu0 %v1757
    %2074 = vmatpush1.bf16.msra.mxu0 %v1756
    %2075 = vmatprep.subr.bf16.mxu0 %v1749
    %2076 = vmatpush1.bf16.msra.mxu0 %v1748
    %2077 = vmatprep.subr.bf16.mxu0 %v1741
    %2078 = vmatpush1.bf16.msra.mxu0 %v1740
    %2079 = vmatprep.subr.bf16.mxu0 %v1733
    %2080 = vmatpush1.bf16.msra.mxu0 %v1732
    %2081 = vmatprep.subr.bf16.mxu0 %v1725
    %2082 = vmatpush1.bf16.msra.mxu0 %v1724
    %2083 = vmatprep.subr.bf16.mxu0 %v1717
    %2084 = vmatpush1.bf16.msra.mxu0 %v1716
    %2085 = vmatprep.subr.bf16.mxu0 %v1709
    %2086 = vmatpush1.bf16.msra.mxu0 %v1708
    %2087 = vmatprep.subr.bf16.mxu0 %v1701
    %2088 = vmatpush1.bf16.msra.mxu0 %v1700
    %2089 = vmatprep.subr.bf16.mxu0 %v1821
    %2090 = vmatpush2.bf16.msra.mxu0 %v1820
    %2091 = vmatprep.subr.bf16.mxu0 %v1813
    %2092 = vmatpush2.bf16.msra.mxu0 %v1812
    %2093 = vmatprep.subr.bf16.mxu0 %v1805
    %2094 = vmatpush2.bf16.msra.mxu0 %v1804
    %2095 = vmatprep.subr.bf16.mxu0 %v1797
    %2096 = vmatpush2.bf16.msra.mxu0 %v1796
    %2097 = vmatprep.subr.bf16.mxu0 %v1789
    %2098 = vmatpush2.bf16.msra.mxu0 %v1788
    %2099 = vmatprep.subr.bf16.mxu0 %v1781
    %2100 = vmatpush2.bf16.msra.mxu0 %v1780
    %2101 = vmatprep.subr.bf16.mxu0 %v1773
    %2102 = vmatpush2.bf16.msra.mxu0 %v1772
    %2103 = vmatprep.subr.bf16.mxu0 %v1765
    %2104 = vmatpush2.bf16.msra.mxu0 %v1764
    %2105 = vmatprep.mubr.bf16.mxu0 %v1139
    %2106 = vmatmul.mubr.bf16.gmra.mxu0 %v1138
    %v2107 = vpop.f32.mrf.mxu0
    %v2108 = vadd.f32 %v1297, %v2107
    %v2109 = vpop.f32.mrf.mxu0
    %v2110 = vadd.f32 %v1301, %v2109
    %v2111 = vpop.f32.mrf.mxu0
    %v2112 = vpop.f32.mrf.mxu0
    %2113 = vdwg.mxu0
    %2114 = vst [vmem:[#allocation13] sm:$0xff] %v1985
    %2115 = vst [vmem:[#allocation13 + $0x8] sm:$0xff] %v1987
    %2116 = vst [vmem:[#allocation13 + $0x10] sm:$0xff] %v2026
    %2117 = vst [vmem:[#allocation13 + $0x18] sm:$0xff] %v2028
    %2118 = vst [vmem:[#allocation13 + $0x20] sm:$0xff] %v2067
    %2119 = vst [vmem:[#allocation13 + $0x28] sm:$0xff] %v2069
    %2120 = vst [vmem:[#allocation13 + $0x30] sm:$0xff] %v2108
    %2121 = vst [vmem:[#allocation13 + $0x38] sm:$0xff] %v2110
    // Predicated region
    $region38: #{tpu_custom_call.1} parent=1 // pred_check
      _
    $region39: #{tpu_custom_call.1} parent=1 // pred_check_branch
      %2123 = sbr.rel (0) target = $region41
    $region40: #{tpu_custom_call.1} parent=1 // pred_region
      %s2125 = ssub.s32 1024, 1024
      %2126 = vsyncadd [#allocation7], %s2125
      %s2128 = sshll.u32 [#allocation13], 4
      %s2129 = int_to_ptr.vmem [resolvable:$true] %s2128
      %2131 = dma.vmem_to_hbm [thread:$0]  %s2129, 1024, %s6, [#allocation7]
    $region41: #{tpu_custom_call.1} parent=1 // pred_fallthru
      _
    // Predicated region
    $region42: #{tpu_custom_call.1} parent=1 // pred_check
      _
    $region43: #{tpu_custom_call.1} parent=1 // pred_check_branch
      %2133 = sbr.rel (0) target = $region45
    $region44: #{tpu_custom_call.1} parent=1 // pred_region
      %2134 = dma.done [#allocation7], 1024
    $region45: #{tpu_custom_call.1} parent=1 // pred_fallthru
      _
    %2135 = vsyncpa [#allocation6], 1
    %2136 = vsyncpa [#allocation9], 1
    %2137 = vsyncpa [#allocation12], 1
    %2138 = vsyncpa [#allocation7], 1

</llo_original>
